<compile_context>
chip_gen: v6e
topology: v6e:2x2x1
jax: 0.10.0
libtpu: 0.0.40
codegen_flags: <defaults>
</compile_context>

<pallas_src>
import math

import jax
import jax.numpy as jnp
from jax.experimental import pallas as pl
from jax.experimental.pallas import tpu as pltpu

# ---- small synthetic model dimensions (tiny T5/BERT-style encoder,
# ---- sequence classification with num_labels = 1) ---------------------------
B = 2            # batch
S = 8            # sequence length (after padding/truncation)
D = 32           # hidden size
H = 4            # attention heads
DH = D // H      # head dim
F = 64           # FFN intermediate size
VOCAB = 128      # vocab size (== MXU K for the embedding one-hot matmul)
NUM_LABELS = 1   # id2label = {0: 'DOSTOYEVSKI'}
EPS = 1e-6

# rows of the packed f32 "vecs" buffer [16, F]
_R_LN1G, _R_LN1B, _R_B1, _R_B2, _R_LN2G, _R_LN2B, _R_WCLS, _R_BCLS = range(8)
_R_POS = 8                     # rows 8 .. 8+S-1 hold the positional embeddings
_VEC_ROWS = _R_POS + S         # = 16


def _layernorm(x, g, b):
    mu = jnp.mean(x, axis=-1, keepdims=True)
    var = jnp.mean((x - mu) ** 2, axis=-1, keepdims=True)
    return (x - mu) * jax.lax.rsqrt(var + EPS) * g + b


def make_encoder_classifier_kernel(bt):
    """Kernel processing one batch tile of `bt` sequences (mt = bt*S rows)."""
    mt = bt * S

    def kernel(ids_ref, emb_ref, w_attn_ref, wff_ref, vecs_ref, logits_ref):
        # ids_ref   : [bt, S]        int32   token ids for this batch tile
        # emb_ref   : [VOCAB, D]     bf16    token embedding table
        # w_attn_ref: [D, 4D]        bf16    [wq*1/sqrt(DH) | wk | wv | wo]
        # wff_ref   : [D, 2F]        bf16    [w1 | w2^T] (lane-dense)
        # vecs_ref  : [16, F]        f32     ln/bias/head rows + positional emb
        # logits_ref: [bt, 1]        f32

        # ---- embedding: K=128 one-hot matmul + in-kernel positional add ----
        ids = ids_ref[...]                                         # [bt, S]
        col = jax.lax.broadcasted_iota(jnp.int32, (bt, S, VOCAB), 2)
        onehot = (col == ids[:, :, None]).astype(jnp.float32)      # [bt, S, VOCAB]
        onehot = onehot.reshape(mt, VOCAB).astype(jnp.bfloat16)
        tok = jnp.dot(onehot, emb_ref[...],
                      preferred_element_type=jnp.float32)           # [mt, D] f32
        pos = vecs_ref[_R_POS:_R_POS + S, :D]                       # [S, D] f32
        h0 = (tok.reshape(bt, S, D) + pos[None, :, :]).reshape(mt, D)

        # ---- fused QKV projection: one full-width (128-lane) MXU push ------
        # (lanes 3D:4D of the result are h @ wo and are simply ignored)
        qkv = jnp.dot(h0.astype(jnp.bfloat16), w_attn_ref[...],
                      preferred_element_type=jnp.float32)           # [mt, 4D]
        q3 = qkv[:, 0:D].reshape(bt, S, D)
        k3 = qkv[:, D:2 * D].reshape(bt, S, D)
        v3 = qkv[:, 2 * D:3 * D].reshape(bt, S, D)

        # ---- attention: static per-head loop (softmax scale folded into wq).
        # NOTE: a fully batched [B,H,S,S] formulation needs a multi-batch-dim
        # dot_general / 4-D transpose that Mosaic does not reliably lower, so
        # the proven single-batch-dim einsum per head is retained.
        ctx_parts = []
        for hh in range(H):
            sl = slice(hh * DH, (hh + 1) * DH)
            s = jnp.einsum('bqd,bkd->bqk', q3[:, :, sl], k3[:, :, sl],
                           preferred_element_type=jnp.float32)      # [bt,S,S]
            p = jnp.exp(s - jnp.max(s, axis=-1, keepdims=True))
            p = p * pl.reciprocal(jnp.sum(p, axis=-1, keepdims=True),
                                  approx=True)
            ctx_parts.append(
                jnp.einsum('bqk,bkd->bqd', p, v3[:, :, sl],
                           preferred_element_type=jnp.float32))     # [bt,S,DH]
        ctx = jnp.concatenate(ctx_parts, axis=-1).reshape(mt, D)    # [mt, D]
        attn = jnp.dot(ctx.astype(jnp.bfloat16), w_attn_ref[:, 3 * D:],
                       preferred_element_type=jnp.float32)          # [mt, D]

        h1 = _layernorm(h0 + attn,
                        vecs_ref[_R_LN1G:_R_LN1G + 1, :D],
                        vecs_ref[_R_LN1B:_R_LN1B + 1, :D])

        # ---- feed-forward (lane-dense packed [w1 | w2^T]) -------------------
        ff = jnp.dot(h1.astype(jnp.bfloat16), wff_ref[:, :F],
                     preferred_element_type=jnp.float32) \
            + vecs_ref[_R_B1:_R_B1 + 1, :F]
        ff = jnp.maximum(ff, 0.0)
        ff2 = jax.lax.dot_general(
            ff.astype(jnp.bfloat16), wff_ref[:, F:],
            dimension_numbers=(((1,), (1,)), ((), ())),   # contract F vs F (w2^T)
            preferred_element_type=jnp.float32) \
            + vecs_ref[_R_B2:_R_B2 + 1, :D]
        h2 = _layernorm(h1 + ff2,
                        vecs_ref[_R_LN2G:_R_LN2G + 1, :D],
                        vecs_ref[_R_LN2B:_R_LN2B + 1, :D])

        # ---- mean pool + classification head (VPU multiply + lane reduce) --
        pooled = jnp.mean(h2.reshape(bt, S, D), axis=1)              # [bt, D]
        wcls = vecs_ref[_R_WCLS:_R_WCLS + 1, :D]                     # [1, D]
        bcls = vecs_ref[_R_BCLS:_R_BCLS + 1, 0:NUM_LABELS]           # [1, 1]
        logits = jnp.sum(pooled * wcls, axis=-1, keepdims=True) + bcls
        logits_ref[...] = logits.astype(logits_ref.dtype)

    return kernel


def init_params(key):
    ks = jax.random.split(key, 9)

    def n(k, shape, scale):
        return (scale * jax.random.normal(k, shape)).astype(jnp.float32)

    tok_emb = n(ks[0], (VOCAB, D), 0.02)
    pos_emb = n(ks[1], (S, D), 0.02)

    # fused attention weights: softmax scale folded into wq
    wq = n(ks[2], (D, D), 1.0 / math.sqrt(D)) * (1.0 / math.sqrt(DH))
    wk = n(ks[3], (D, D), 1.0 / math.sqrt(D))
    wv = n(ks[4], (D, D), 1.0 / math.sqrt(D))
    wo = n(ks[5], (D, D), 1.0 / math.sqrt(D))
    w_attn = jnp.concatenate([wq, wk, wv, wo], axis=1)               # [D, 4D]

    # FFN weights packed lane-dense: [w1 | w2^T] -> [D, 2F] = [32, 128]
    w1 = n(ks[6], (D, F), 1.0 / math.sqrt(D))
    w2 = n(ks[7], (F, D), 1.0 / math.sqrt(F))
    wff = jnp.concatenate([w1, w2.T], axis=1)

    def pad_row(v):
        return jnp.pad(v, ((0, 0), (0, F - v.shape[1])))

    wcls = n(ks[8], (1, D), 1.0 / math.sqrt(D))
    vecs = jnp.concatenate([
        pad_row(jnp.ones((1, D), jnp.float32)),                      # ln1 gamma
        pad_row(jnp.zeros((1, D), jnp.float32)),                     # ln1 beta
        jnp.zeros((1, F), jnp.float32),                              # ffn bias 1
        pad_row(jnp.zeros((1, D), jnp.float32)),                     # ffn bias 2
        pad_row(jnp.ones((1, D), jnp.float32)),                      # ln2 gamma
        pad_row(jnp.zeros((1, D), jnp.float32)),                     # ln2 beta
        pad_row(wcls),                                               # cls weight
        pad_row(jnp.zeros((1, NUM_LABELS), jnp.float32)),            # cls bias
        pad_row(pos_emb),                                            # pos emb (S rows)
    ], axis=0)                                                       # [16, F] f32

    return {
        'emb': tok_emb.astype(jnp.bfloat16),     # [VOCAB, D]
        'w_attn': w_attn.astype(jnp.bfloat16),   # [D, 4D]
        'wff': wff.astype(jnp.bfloat16),         # [D, 2F]
        'vecs': vecs,                            # [16, F] f32
    }


@jax.jit
def discriminator_logits(token_ids, params):
    """token_ids: int32 [B, S]  ->  logits float32 [B, NUM_LABELS]."""
    b, s = token_ids.shape
    assert s == S
    bt = b if b <= 16 else 16            # batch tile (bt*S rows per MXU push)
    assert b % bt == 0
    n_tiles = b // bt
    mt = bt * S

    flops = n_tiles * (
        2 * mt * VOCAB * D          # embedding one-hot matmul
        + 2 * mt * D * (4 * D)      # fused QKV
        + 4 * bt * S * S * D        # attention scores + context (all heads)
        + 2 * mt * D * D            # output projection
        + 4 * mt * D * F            # FFN up + down
        + 12 * mt * D)              # layernorms / residuals / pooling (approx)
    transcendentals = n_tiles * (bt * H * S * S + 2 * mt + bt * H * S)
    bytes_accessed = (token_ids.size * 4
                      + params['emb'].size * 2 + params['w_attn'].size * 2
                      + params['wff'].size * 2 + params['vecs'].size * 4
                      + b * NUM_LABELS * 4)

    kernel = make_encoder_classifier_kernel(bt)
    return pl.pallas_call(
        kernel,
        out_shape=jax.ShapeDtypeStruct((b, NUM_LABELS), jnp.float32),
        grid=(n_tiles,),
        in_specs=[
            pl.BlockSpec((bt, S), lambda i: (i, 0)),             # token ids (tiled)
            pl.BlockSpec((VOCAB, D), lambda i: (0, 0)),          # emb table (resident)
            pl.BlockSpec((D, 4 * D), lambda i: (0, 0)),          # fused attn weights
            pl.BlockSpec((D, 2 * F), lambda i: (0, 0)),          # packed [w1 | w2^T]
            pl.BlockSpec((_VEC_ROWS, F), lambda i: (0, 0)),      # packed vectors
        ],
        out_specs=pl.BlockSpec((bt, NUM_LABELS), lambda i: (i, 0)),
        compiler_params=pltpu.CompilerParams(
            dimension_semantics=("parallel",)),
        cost_estimate=pl.CostEstimate(flops=flops,
                                      transcendentals=transcendentals,
                                      bytes_accessed=bytes_accessed),
    )(token_ids, params['emb'], params['w_attn'], params['wff'], params['vecs'])


if __name__ == "__main__":
    key = jax.random.PRNGKey(0)
    k_tok, k_param = jax.random.split(key)

    params = init_params(k_param)
    # TODO(synk): HF tokenizer (string -> ids) has no Pallas equivalent;
    # deterministic random token ids stand in for tokenizer output.
    token_ids = jax.random.randint(k_tok, (B, S), 0, VOCAB, dtype=jnp.int32)

    logits = discriminator_logits(token_ids, params)
    jax.block_until_ready(logits)

    assert logits.shape == (B, NUM_LABELS)
    assert logits.dtype == jnp.float32
    assert bool(jnp.all(jnp.isfinite(logits)))
    print("KERNEL_OK")
</pallas_src>

<mosaic_0001>
module attributes {stable_mosaic.version = 11 : i64} {
  func.func @kernel(%arg0: i32, %arg1: memref<2x8xi32, #tpu.memory_space<vmem>>, %arg2: memref<128x32xbf16, #tpu.memory_space<vmem>>, %arg3: memref<32x128xbf16, #tpu.memory_space<vmem>>, %arg4: memref<32x128xbf16, #tpu.memory_space<vmem>>, %arg5: memref<16x64xf32, #tpu.memory_space<vmem>>, %arg6: memref<2x1xf32, #tpu.memory_space<vmem>>) attributes {dimension_semantics = [#tpu.dimension_semantics<parallel>], iteration_bounds = array<i64: 1>, scalar_prefetch = 0 : i64, scratch_operands = 0 : i64, tpu.core_type = #tpu.core_type<tc>, window_params = [{transform_indices = @transform_0, window_bounds = array<i64: 2, 8>}, {pipeline_mode = #tpu.pipeline_mode<synchronous>, transform_indices = @transform_1, window_bounds = array<i64: 128, 32>}, {pipeline_mode = #tpu.pipeline_mode<synchronous>, transform_indices = @transform_2, window_bounds = array<i64: 32, 128>}, {pipeline_mode = #tpu.pipeline_mode<synchronous>, transform_indices = @transform_3, window_bounds = array<i64: 32, 128>}, {pipeline_mode = #tpu.pipeline_mode<synchronous>, transform_indices = @transform_4, window_bounds = array<i64: 16, 64>}, {transform_indices = @transform_5, window_bounds = array<i64: 2, 1>}]} {
    %c0 = arith.constant 0 : index
    %c0_0 = arith.constant 0 : index
    %0 = vector.load %arg1[%c0, %c0_0] : memref<2x8xi32, #tpu.memory_space<vmem>>, vector<2x8xi32>
    %1 = tpu.iota {dimensions = array<i32: 2>} : vector<2x8x128xi32>
    %2 = vector.shape_cast %0 : vector<2x8xi32> to vector<2x8x1xi32>
    %3 = vector.broadcast %2 : vector<2x8x1xi32> to vector<2x8x128xi32>
    %4 = arith.cmpi eq, %1, %3 : vector<2x8x128xi32>
    %5 = arith.extui %4 : vector<2x8x128xi1> to vector<2x8x128xi32>
    %6 = arith.sitofp %5 : vector<2x8x128xi32> to vector<2x8x128xf32>
    %7 = vector.shape_cast %6 : vector<2x8x128xf32> to vector<16x128xf32>
    %8 = arith.truncf %7 : vector<16x128xf32> to vector<16x128xbf16>
    %c0_1 = arith.constant 0 : index
    %c0_2 = arith.constant 0 : index
    %9 = vector.load %arg2[%c0_1, %c0_2] : memref<128x32xbf16, #tpu.memory_space<vmem>>, vector<128x32xbf16>
    %cst = arith.constant dense<0.000000e+00> : vector<16x32xf32>
    %10 = tpu.matmul %8, %9, %cst {dimension_numbers = #tpu.dot_dimension_numbers<[1], [0], [0], [1], [0, 0, 1, 1], [], []>} : vector<16x128xbf16>, vector<128x32xbf16>, vector<16x32xf32> -> vector<16x32xf32>
    %c8 = arith.constant 8 : index
    %c0_3 = arith.constant 0 : index
    %11 = vector.load %arg5[%c8, %c0_3] : memref<16x64xf32, #tpu.memory_space<vmem>>, vector<8x32xf32>
    %12 = vector.shape_cast %10 : vector<16x32xf32> to vector<2x8x32xf32>
    %13 = vector.shape_cast %11 : vector<8x32xf32> to vector<1x8x32xf32>
    %14 = vector.broadcast %13 : vector<1x8x32xf32> to vector<2x8x32xf32>
    %15 = arith.addf %12, %14 : vector<2x8x32xf32>
    %16 = vector.shape_cast %15 : vector<2x8x32xf32> to vector<16x32xf32>
    %17 = arith.truncf %16 : vector<16x32xf32> to vector<16x32xbf16>
    %c0_4 = arith.constant 0 : index
    %c0_5 = arith.constant 0 : index
    %18 = vector.load %arg3[%c0_4, %c0_5] : memref<32x128xbf16, #tpu.memory_space<vmem>>, vector<32x128xbf16>
    %cst_6 = arith.constant dense<0.000000e+00> : vector<16x128xf32>
    %19 = tpu.matmul %17, %18, %cst_6 {dimension_numbers = #tpu.dot_dimension_numbers<[1], [0], [0], [1], [0, 0, 1, 1], [], []>} : vector<16x32xbf16>, vector<32x128xbf16>, vector<16x128xf32> -> vector<16x128xf32>
    %20 = vector.extract_strided_slice %19 {offsets = [0, 0], sizes = [16, 32], strides = [1, 1]} : vector<16x128xf32> to vector<16x32xf32>
    %21 = vector.shape_cast %20 : vector<16x32xf32> to vector<2x8x32xf32>
    %22 = vector.extract_strided_slice %19 {offsets = [0, 32], sizes = [16, 32], strides = [1, 1]} : vector<16x128xf32> to vector<16x32xf32>
    %23 = vector.shape_cast %22 : vector<16x32xf32> to vector<2x8x32xf32>
    %24 = vector.extract_strided_slice %19 {offsets = [0, 64], sizes = [16, 32], strides = [1, 1]} : vector<16x128xf32> to vector<16x32xf32>
    %25 = vector.shape_cast %24 : vector<16x32xf32> to vector<2x8x32xf32>
    %26 = vector.extract_strided_slice %21 {offsets = [0, 0, 0], sizes = [2, 8, 8], strides = [1, 1, 1]} : vector<2x8x32xf32> to vector<2x8x8xf32>
    %27 = vector.extract_strided_slice %23 {offsets = [0, 0, 0], sizes = [2, 8, 8], strides = [1, 1, 1]} : vector<2x8x32xf32> to vector<2x8x8xf32>
    "tpu.trace_start"() <{level = 10 : i32, message = "bqd,bkd->bqk"}> : () -> ()
    %cst_7 = arith.constant dense<0.000000e+00> : vector<2x8x8xf32>
    %28 = tpu.matmul %26, %27, %cst_7 {dimension_numbers = #tpu.dot_dimension_numbers<[2], [2], [1], [1], [0, 0, 0, 1, 1, 1], [0], [0]>} : vector<2x8x8xf32>, vector<2x8x8xf32>, vector<2x8x8xf32> -> vector<2x8x8xf32>
    "tpu.trace_stop"() : () -> ()
    %cst_8 = arith.constant dense<0xFF800000> : vector<2x8xf32>
    %29 = vector.multi_reduction <maximumf>, %28, %cst_8 [2] : vector<2x8x8xf32> to vector<2x8xf32>
    %30 = vector.shape_cast %29 : vector<2x8xf32> to vector<2x8x1xf32>
    %31 = vector.broadcast %30 : vector<2x8x1xf32> to vector<2x8x8xf32>
    %32 = arith.subf %28, %31 : vector<2x8x8xf32>
    %33 = math.exp %32 : vector<2x8x8xf32>
    %cst_9 = arith.constant dense<0.000000e+00> : vector<2x8xf32>
    %34 = vector.multi_reduction <add>, %33, %cst_9 [2] : vector<2x8x8xf32> to vector<2x8xf32>
    %35 = vector.shape_cast %34 : vector<2x8xf32> to vector<2x8x1xf32>
    %36 = tpu.reciprocal %35 {approx = true} : vector<2x8x1xf32> -> vector<2x8x1xf32>
    %37 = vector.broadcast %36 : vector<2x8x1xf32> to vector<2x8x8xf32>
    %38 = arith.mulf %33, %37 : vector<2x8x8xf32>
    %39 = vector.extract_strided_slice %25 {offsets = [0, 0, 0], sizes = [2, 8, 8], strides = [1, 1, 1]} : vector<2x8x32xf32> to vector<2x8x8xf32>
    "tpu.trace_start"() <{level = 10 : i32, message = "bqk,bkd->bqd"}> : () -> ()
    %cst_10 = arith.constant dense<0.000000e+00> : vector<2x8x8xf32>
    %40 = tpu.matmul %38, %39, %cst_10 {dimension_numbers = #tpu.dot_dimension_numbers<[2], [1], [1], [2], [0, 0, 0, 1, 1, 2], [0], [0]>} : vector<2x8x8xf32>, vector<2x8x8xf32>, vector<2x8x8xf32> -> vector<2x8x8xf32>
    "tpu.trace_stop"() : () -> ()
    %41 = vector.extract_strided_slice %21 {offsets = [0, 0, 8], sizes = [2, 8, 8], strides = [1, 1, 1]} : vector<2x8x32xf32> to vector<2x8x8xf32>
    %42 = vector.extract_strided_slice %23 {offsets = [0, 0, 8], sizes = [2, 8, 8], strides = [1, 1, 1]} : vector<2x8x32xf32> to vector<2x8x8xf32>
    "tpu.trace_start"() <{level = 10 : i32, message = "bqd,bkd->bqk"}> : () -> ()
    %cst_11 = arith.constant dense<0.000000e+00> : vector<2x8x8xf32>
    %43 = tpu.matmul %41, %42, %cst_11 {dimension_numbers = #tpu.dot_dimension_numbers<[2], [2], [1], [1], [0, 0, 0, 1, 1, 1], [0], [0]>} : vector<2x8x8xf32>, vector<2x8x8xf32>, vector<2x8x8xf32> -> vector<2x8x8xf32>
    "tpu.trace_stop"() : () -> ()
    %cst_12 = arith.constant dense<0xFF800000> : vector<2x8xf32>
    %44 = vector.multi_reduction <maximumf>, %43, %cst_12 [2] : vector<2x8x8xf32> to vector<2x8xf32>
    %45 = vector.shape_cast %44 : vector<2x8xf32> to vector<2x8x1xf32>
    %46 = vector.broadcast %45 : vector<2x8x1xf32> to vector<2x8x8xf32>
    %47 = arith.subf %43, %46 : vector<2x8x8xf32>
    %48 = math.exp %47 : vector<2x8x8xf32>
    %cst_13 = arith.constant dense<0.000000e+00> : vector<2x8xf32>
    %49 = vector.multi_reduction <add>, %48, %cst_13 [2] : vector<2x8x8xf32> to vector<2x8xf32>
    %50 = vector.shape_cast %49 : vector<2x8xf32> to vector<2x8x1xf32>
    %51 = tpu.reciprocal %50 {approx = true} : vector<2x8x1xf32> -> vector<2x8x1xf32>
    %52 = vector.broadcast %51 : vector<2x8x1xf32> to vector<2x8x8xf32>
    %53 = arith.mulf %48, %52 : vector<2x8x8xf32>
    %54 = vector.extract_strided_slice %25 {offsets = [0, 0, 8], sizes = [2, 8, 8], strides = [1, 1, 1]} : vector<2x8x32xf32> to vector<2x8x8xf32>
    "tpu.trace_start"() <{level = 10 : i32, message = "bqk,bkd->bqd"}> : () -> ()
    %cst_14 = arith.constant dense<0.000000e+00> : vector<2x8x8xf32>
    %55 = tpu.matmul %53, %54, %cst_14 {dimension_numbers = #tpu.dot_dimension_numbers<[2], [1], [1], [2], [0, 0, 0, 1, 1, 2], [0], [0]>} : vector<2x8x8xf32>, vector<2x8x8xf32>, vector<2x8x8xf32> -> vector<2x8x8xf32>
    "tpu.trace_stop"() : () -> ()
    %56 = vector.extract_strided_slice %21 {offsets = [0, 0, 16], sizes = [2, 8, 8], strides = [1, 1, 1]} : vector<2x8x32xf32> to vector<2x8x8xf32>
    %57 = vector.extract_strided_slice %23 {offsets = [0, 0, 16], sizes = [2, 8, 8], strides = [1, 1, 1]} : vector<2x8x32xf32> to vector<2x8x8xf32>
    "tpu.trace_start"() <{level = 10 : i32, message = "bqd,bkd->bqk"}> : () -> ()
    %cst_15 = arith.constant dense<0.000000e+00> : vector<2x8x8xf32>
    %58 = tpu.matmul %56, %57, %cst_15 {dimension_numbers = #tpu.dot_dimension_numbers<[2], [2], [1], [1], [0, 0, 0, 1, 1, 1], [0], [0]>} : vector<2x8x8xf32>, vector<2x8x8xf32>, vector<2x8x8xf32> -> vector<2x8x8xf32>
    "tpu.trace_stop"() : () -> ()
    %cst_16 = arith.constant dense<0xFF800000> : vector<2x8xf32>
    %59 = vector.multi_reduction <maximumf>, %58, %cst_16 [2] : vector<2x8x8xf32> to vector<2x8xf32>
    %60 = vector.shape_cast %59 : vector<2x8xf32> to vector<2x8x1xf32>
    %61 = vector.broadcast %60 : vector<2x8x1xf32> to vector<2x8x8xf32>
    %62 = arith.subf %58, %61 : vector<2x8x8xf32>
    %63 = math.exp %62 : vector<2x8x8xf32>
    %cst_17 = arith.constant dense<0.000000e+00> : vector<2x8xf32>
    %64 = vector.multi_reduction <add>, %63, %cst_17 [2] : vector<2x8x8xf32> to vector<2x8xf32>
    %65 = vector.shape_cast %64 : vector<2x8xf32> to vector<2x8x1xf32>
    %66 = tpu.reciprocal %65 {approx = true} : vector<2x8x1xf32> -> vector<2x8x1xf32>
    %67 = vector.broadcast %66 : vector<2x8x1xf32> to vector<2x8x8xf32>
    %68 = arith.mulf %63, %67 : vector<2x8x8xf32>
    %69 = vector.extract_strided_slice %25 {offsets = [0, 0, 16], sizes = [2, 8, 8], strides = [1, 1, 1]} : vector<2x8x32xf32> to vector<2x8x8xf32>
    "tpu.trace_start"() <{level = 10 : i32, message = "bqk,bkd->bqd"}> : () -> ()
    %cst_18 = arith.constant dense<0.000000e+00> : vector<2x8x8xf32>
    %70 = tpu.matmul %68, %69, %cst_18 {dimension_numbers = #tpu.dot_dimension_numbers<[2], [1], [1], [2], [0, 0, 0, 1, 1, 2], [0], [0]>} : vector<2x8x8xf32>, vector<2x8x8xf32>, vector<2x8x8xf32> -> vector<2x8x8xf32>
    "tpu.trace_stop"() : () -> ()
    %71 = vector.extract_strided_slice %21 {offsets = [0, 0, 24], sizes = [2, 8, 8], strides = [1, 1, 1]} : vector<2x8x32xf32> to vector<2x8x8xf32>
    %72 = vector.extract_strided_slice %23 {offsets = [0, 0, 24], sizes = [2, 8, 8], strides = [1, 1, 1]} : vector<2x8x32xf32> to vector<2x8x8xf32>
    "tpu.trace_start"() <{level = 10 : i32, message = "bqd,bkd->bqk"}> : () -> ()
    %cst_19 = arith.constant dense<0.000000e+00> : vector<2x8x8xf32>
    %73 = tpu.matmul %71, %72, %cst_19 {dimension_numbers = #tpu.dot_dimension_numbers<[2], [2], [1], [1], [0, 0, 0, 1, 1, 1], [0], [0]>} : vector<2x8x8xf32>, vector<2x8x8xf32>, vector<2x8x8xf32> -> vector<2x8x8xf32>
    "tpu.trace_stop"() : () -> ()
    %cst_20 = arith.constant dense<0xFF800000> : vector<2x8xf32>
    %74 = vector.multi_reduction <maximumf>, %73, %cst_20 [2] : vector<2x8x8xf32> to vector<2x8xf32>
    %75 = vector.shape_cast %74 : vector<2x8xf32> to vector<2x8x1xf32>
    %76 = vector.broadcast %75 : vector<2x8x1xf32> to vector<2x8x8xf32>
    %77 = arith.subf %73, %76 : vector<2x8x8xf32>
    %78 = math.exp %77 : vector<2x8x8xf32>
    %cst_21 = arith.constant dense<0.000000e+00> : vector<2x8xf32>
    %79 = vector.multi_reduction <add>, %78, %cst_21 [2] : vector<2x8x8xf32> to vector<2x8xf32>
    %80 = vector.shape_cast %79 : vector<2x8xf32> to vector<2x8x1xf32>
    %81 = tpu.reciprocal %80 {approx = true} : vector<2x8x1xf32> -> vector<2x8x1xf32>
    %82 = vector.broadcast %81 : vector<2x8x1xf32> to vector<2x8x8xf32>
    %83 = arith.mulf %78, %82 : vector<2x8x8xf32>
    %84 = vector.extract_strided_slice %25 {offsets = [0, 0, 24], sizes = [2, 8, 8], strides = [1, 1, 1]} : vector<2x8x32xf32> to vector<2x8x8xf32>
    "tpu.trace_start"() <{level = 10 : i32, message = "bqk,bkd->bqd"}> : () -> ()
    %cst_22 = arith.constant dense<0.000000e+00> : vector<2x8x8xf32>
    %85 = tpu.matmul %83, %84, %cst_22 {dimension_numbers = #tpu.dot_dimension_numbers<[2], [1], [1], [2], [0, 0, 0, 1, 1, 2], [0], [0]>} : vector<2x8x8xf32>, vector<2x8x8xf32>, vector<2x8x8xf32> -> vector<2x8x8xf32>
    "tpu.trace_stop"() : () -> ()
    %86 = tpu.concatenate %40, %55, %70, %85 in 2 : vector<2x8x8xf32>, vector<2x8x8xf32>, vector<2x8x8xf32>, vector<2x8x8xf32> -> vector<2x8x32xf32>
    %87 = vector.shape_cast %86 : vector<2x8x32xf32> to vector<16x32xf32>
    %88 = arith.truncf %87 : vector<16x32xf32> to vector<16x32xbf16>
    %c0_23 = arith.constant 0 : index
    %c96 = arith.constant 96 : index
    %89 = vector.load %arg3[%c0_23, %c96] : memref<32x128xbf16, #tpu.memory_space<vmem>>, vector<32x32xbf16>
    %cst_24 = arith.constant dense<0.000000e+00> : vector<16x32xf32>
    %90 = tpu.matmul %88, %89, %cst_24 {dimension_numbers = #tpu.dot_dimension_numbers<[1], [0], [0], [1], [0, 0, 1, 1], [], []>} : vector<16x32xbf16>, vector<32x32xbf16>, vector<16x32xf32> -> vector<16x32xf32>
    %91 = arith.addf %16, %90 : vector<16x32xf32>
    %c0_25 = arith.constant 0 : index
    %c0_26 = arith.constant 0 : index
    %92 = vector.load %arg5[%c0_25, %c0_26] : memref<16x64xf32, #tpu.memory_space<vmem>>, vector<1x32xf32>
    %c1 = arith.constant 1 : index
    %c0_27 = arith.constant 0 : index
    %93 = vector.load %arg5[%c1, %c0_27] : memref<16x64xf32, #tpu.memory_space<vmem>>, vector<1x32xf32>
    %cst_28 = arith.constant dense<0.000000e+00> : vector<16xf32>
    %94 = vector.multi_reduction <add>, %91, %cst_28 [1] : vector<16x32xf32> to vector<16xf32>
    %95 = vector.shape_cast %94 : vector<16xf32> to vector<16x1xf32>
    %cst_29 = arith.constant 3.200000e+01 : f32
    %96 = vector.broadcast %cst_29 : f32 to vector<16x1xf32>
    %97 = arith.divf %95, %96 : vector<16x1xf32>
    %98 = vector.broadcast %97 : vector<16x1xf32> to vector<16x32xf32>
    %99 = arith.subf %91, %98 : vector<16x32xf32>
    %100 = arith.mulf %99, %99 : vector<16x32xf32>
    %cst_30 = arith.constant dense<0.000000e+00> : vector<16xf32>
    %101 = vector.multi_reduction <add>, %100, %cst_30 [1] : vector<16x32xf32> to vector<16xf32>
    %102 = vector.shape_cast %101 : vector<16xf32> to vector<16x1xf32>
    %cst_31 = arith.constant 3.200000e+01 : f32
    %103 = vector.broadcast %cst_31 : f32 to vector<16x1xf32>
    %104 = arith.divf %102, %103 : vector<16x1xf32>
    %105 = vector.broadcast %97 : vector<16x1xf32> to vector<16x32xf32>
    %106 = arith.subf %91, %105 : vector<16x32xf32>
    %cst_32 = arith.constant 9.99999997E-7 : f32
    %107 = vector.broadcast %cst_32 : f32 to vector<16x1xf32>
    %108 = arith.addf %104, %107 : vector<16x1xf32>
    %109 = math.rsqrt %108 : vector<16x1xf32>
    %110 = vector.broadcast %109 : vector<16x1xf32> to vector<16x32xf32>
    %111 = arith.mulf %106, %110 : vector<16x32xf32>
    %112 = vector.broadcast %92 : vector<1x32xf32> to vector<16x32xf32>
    %113 = arith.mulf %111, %112 : vector<16x32xf32>
    %114 = vector.broadcast %93 : vector<1x32xf32> to vector<16x32xf32>
    %115 = arith.addf %113, %114 : vector<16x32xf32>
    %116 = arith.truncf %115 : vector<16x32xf32> to vector<16x32xbf16>
    %c0_33 = arith.constant 0 : index
    %c0_34 = arith.constant 0 : index
    %117 = vector.load %arg4[%c0_33, %c0_34] : memref<32x128xbf16, #tpu.memory_space<vmem>>, vector<32x64xbf16>
    %cst_35 = arith.constant dense<0.000000e+00> : vector<16x64xf32>
    %118 = tpu.matmul %116, %117, %cst_35 {dimension_numbers = #tpu.dot_dimension_numbers<[1], [0], [0], [1], [0, 0, 1, 1], [], []>} : vector<16x32xbf16>, vector<32x64xbf16>, vector<16x64xf32> -> vector<16x64xf32>
    %c2 = arith.constant 2 : index
    %c0_36 = arith.constant 0 : index
    %119 = vector.load %arg5[%c2, %c0_36] : memref<16x64xf32, #tpu.memory_space<vmem>>, vector<1x64xf32>
    %120 = vector.broadcast %119 : vector<1x64xf32> to vector<16x64xf32>
    %121 = arith.addf %118, %120 : vector<16x64xf32>
    %cst_37 = arith.constant 0.000000e+00 : f32
    %122 = vector.broadcast %cst_37 : f32 to vector<16x64xf32>
    %123 = arith.maximumf %121, %122 : vector<16x64xf32>
    %124 = arith.truncf %123 : vector<16x64xf32> to vector<16x64xbf16>
    %c0_38 = arith.constant 0 : index
    %c64 = arith.constant 64 : index
    %125 = vector.load %arg4[%c0_38, %c64] : memref<32x128xbf16, #tpu.memory_space<vmem>>, vector<32x64xbf16>
    %cst_39 = arith.constant dense<0.000000e+00> : vector<16x32xf32>
    %126 = tpu.matmul %124, %125, %cst_39 {dimension_numbers = #tpu.dot_dimension_numbers<[1], [1], [0], [0], [0, 0, 1, 0], [], []>} : vector<16x64xbf16>, vector<32x64xbf16>, vector<16x32xf32> -> vector<16x32xf32>
    %c3 = arith.constant 3 : index
    %c0_40 = arith.constant 0 : index
    %127 = vector.load %arg5[%c3, %c0_40] : memref<16x64xf32, #tpu.memory_space<vmem>>, vector<1x32xf32>
    %128 = vector.broadcast %127 : vector<1x32xf32> to vector<16x32xf32>
    %129 = arith.addf %126, %128 : vector<16x32xf32>
    %130 = arith.addf %115, %129 : vector<16x32xf32>
    %c4 = arith.constant 4 : index
    %c0_41 = arith.constant 0 : index
    %131 = vector.load %arg5[%c4, %c0_41] : memref<16x64xf32, #tpu.memory_space<vmem>>, vector<1x32xf32>
    %c5 = arith.constant 5 : index
    %c0_42 = arith.constant 0 : index
    %132 = vector.load %arg5[%c5, %c0_42] : memref<16x64xf32, #tpu.memory_space<vmem>>, vector<1x32xf32>
    %cst_43 = arith.constant dense<0.000000e+00> : vector<16xf32>
    %133 = vector.multi_reduction <add>, %130, %cst_43 [1] : vector<16x32xf32> to vector<16xf32>
    %134 = vector.shape_cast %133 : vector<16xf32> to vector<16x1xf32>
    %cst_44 = arith.constant 3.200000e+01 : f32
    %135 = vector.broadcast %cst_44 : f32 to vector<16x1xf32>
    %136 = arith.divf %134, %135 : vector<16x1xf32>
    %137 = vector.broadcast %136 : vector<16x1xf32> to vector<16x32xf32>
    %138 = arith.subf %130, %137 : vector<16x32xf32>
    %139 = arith.mulf %138, %138 : vector<16x32xf32>
    %cst_45 = arith.constant dense<0.000000e+00> : vector<16xf32>
    %140 = vector.multi_reduction <add>, %139, %cst_45 [1] : vector<16x32xf32> to vector<16xf32>
    %141 = vector.shape_cast %140 : vector<16xf32> to vector<16x1xf32>
    %cst_46 = arith.constant 3.200000e+01 : f32
    %142 = vector.broadcast %cst_46 : f32 to vector<16x1xf32>
    %143 = arith.divf %141, %142 : vector<16x1xf32>
    %144 = vector.broadcast %136 : vector<16x1xf32> to vector<16x32xf32>
    %145 = arith.subf %130, %144 : vector<16x32xf32>
    %cst_47 = arith.constant 9.99999997E-7 : f32
    %146 = vector.broadcast %cst_47 : f32 to vector<16x1xf32>
    %147 = arith.addf %143, %146 : vector<16x1xf32>
    %148 = math.rsqrt %147 : vector<16x1xf32>
    %149 = vector.broadcast %148 : vector<16x1xf32> to vector<16x32xf32>
    %150 = arith.mulf %145, %149 : vector<16x32xf32>
    %151 = vector.broadcast %131 : vector<1x32xf32> to vector<16x32xf32>
    %152 = arith.mulf %150, %151 : vector<16x32xf32>
    %153 = vector.broadcast %132 : vector<1x32xf32> to vector<16x32xf32>
    %154 = arith.addf %152, %153 : vector<16x32xf32>
    %155 = vector.shape_cast %154 : vector<16x32xf32> to vector<2x8x32xf32>
    %cst_48 = arith.constant dense<0.000000e+00> : vector<2x32xf32>
    %156 = vector.multi_reduction <add>, %155, %cst_48 [1] : vector<2x8x32xf32> to vector<2x32xf32>
    %cst_49 = arith.constant 8.000000e+00 : f32
    %157 = vector.broadcast %cst_49 : f32 to vector<2x32xf32>
    %158 = arith.divf %156, %157 : vector<2x32xf32>
    %c6 = arith.constant 6 : index
    %c0_50 = arith.constant 0 : index
    %159 = vector.load %arg5[%c6, %c0_50] : memref<16x64xf32, #tpu.memory_space<vmem>>, vector<1x32xf32>
    %c7 = arith.constant 7 : index
    %c0_51 = arith.constant 0 : index
    %160 = vector.load %arg5[%c7, %c0_51] : memref<16x64xf32, #tpu.memory_space<vmem>>, vector<1x1xf32>
    %161 = vector.broadcast %159 : vector<1x32xf32> to vector<2x32xf32>
    %162 = arith.mulf %158, %161 : vector<2x32xf32>
    %cst_52 = arith.constant dense<0.000000e+00> : vector<2xf32>
    %163 = vector.multi_reduction <add>, %162, %cst_52 [1] : vector<2x32xf32> to vector<2xf32>
    %164 = vector.shape_cast %163 : vector<2xf32> to vector<2x1xf32>
    %165 = vector.broadcast %160 : vector<1x1xf32> to vector<2x1xf32>
    %166 = arith.addf %164, %165 : vector<2x1xf32>
    %c0_53 = arith.constant 0 : index
    %c0_54 = arith.constant 0 : index
    %167 = vector.load %arg6[%c0_53, %c0_54] : memref<2x1xf32, #tpu.memory_space<vmem>>, vector<2x1xf32>
    tpu.vector_store %arg6[%c0_53, %c0_54], %166 {strides = array<i32>} : memref<2x1xf32, #tpu.memory_space<vmem>>, vector<2x1xf32>,
    return
  }
  func.func @transform_0(%arg0: i32) -> (i32, i32) {
    %c0_i32 = arith.constant 0 : i32
    %c0_i32_0 = arith.constant 0 : i32
    return %arg0, %c0_i32 : i32, i32
  }
  func.func @transform_1(%arg0: i32) -> (i32, i32) {
    %c0_i32 = arith.constant 0 : i32
    %c0_i32_0 = arith.constant 0 : i32
    %c0_i32_1 = arith.constant 0 : i32
    return %c0_i32, %c0_i32_0 : i32, i32
  }
  func.func @transform_2(%arg0: i32) -> (i32, i32) {
    %c0_i32 = arith.constant 0 : i32
    %c0_i32_0 = arith.constant 0 : i32
    %c0_i32_1 = arith.constant 0 : i32
    return %c0_i32, %c0_i32_0 : i32, i32
  }
  func.func @transform_3(%arg0: i32) -> (i32, i32) {
    %c0_i32 = arith.constant 0 : i32
    %c0_i32_0 = arith.constant 0 : i32
    %c0_i32_1 = arith.constant 0 : i32
    return %c0_i32, %c0_i32_0 : i32, i32
  }
  func.func @transform_4(%arg0: i32) -> (i32, i32) {
    %c0_i32 = arith.constant 0 : i32
    %c0_i32_0 = arith.constant 0 : i32
    %c0_i32_1 = arith.constant 0 : i32
    return %c0_i32, %c0_i32_0 : i32, i32
  }
  func.func @transform_5(%arg0: i32) -> (i32, i32) {
    %c0_i32 = arith.constant 0 : i32
    %c0_i32_0 = arith.constant 0 : i32
    return %arg0, %c0_i32 : i32, i32
  }
}

</mosaic_0001>

<llo_original>
// kernel: discriminator_logits.1
$region0: #{discriminator_logits.1}
  #allocation0 [shape = 'u32[]', space=smem, size = 0x4, offset = 0x4, fixed_abs, tag = 'smem constant byte address 0x4 - core index']
  #allocation1 [shape = 'u32[144,128]{1,0:T(1,128)}', space=vmem, size = 0x12000, scoped, tag = 'internal scratch']
  %s0 = inlined_call_operand.vmem [shape: s32[2,8], index: 0, kind: input, shape index: {}]
  %s1 = inlined_call_operand.vmem [shape: bf16[128,32], index: 1, kind: input, shape index: {}]
  %s2 = inlined_call_operand.vmem [shape: bf16[32,128], index: 2, kind: input, shape index: {}]
  %s3 = inlined_call_operand.vmem [shape: bf16[32,128], index: 3, kind: input, shape index: {}]
  %s4 = inlined_call_operand.vmem [shape: f32[16,64], index: 4, kind: input, shape index: {}]
  %s5 = inlined_call_operand.vmem [shape: f32[2,1], index: 5, kind: output, shape index: {}]
  %s6 = sld [smem:[#allocation0]]
  $region30: #{discriminator_logits.1} parent=0
    _
  %s8 = ssub.s32 1, %s6
  %s9 = scalar_select 0, %s8, %s6
  // Predicated region
  $region2: #{discriminator_logits.1} parent=0 // pred_check
    _
  $region3: #{discriminator_logits.1} parent=0 // pred_check_branch
    %11 = sbr.rel (0) target = $region5
  $region4: #{discriminator_logits.1} parent=0 // pred_region
    _
  $region5: #{discriminator_logits.1} parent=0 // pred_fallthru
    _
  // Predicated region
  $region6: #{discriminator_logits.1} parent=0 // pred_check
    _
  $region7: #{discriminator_logits.1} parent=0 // pred_check_branch
    %13 = sbr.rel (0) target = $region9
  $region8: #{discriminator_logits.1} parent=0 // pred_region
    _
  $region9: #{discriminator_logits.1} parent=0 // pred_fallthru
    _
  // Predicated region
  $region10: #{discriminator_logits.1} parent=0 // pred_check
    _
  $region11: #{discriminator_logits.1} parent=0 // pred_check_branch
    %15 = sbr.rel (0) target = $region13
  $region12: #{discriminator_logits.1} parent=0 // pred_region
    _
  $region13: #{discriminator_logits.1} parent=0 // pred_fallthru
    _
  // Predicated region
  $region14: #{discriminator_logits.1} parent=0 // pred_check
    _
  $region15: #{discriminator_logits.1} parent=0 // pred_check_branch
    %17 = sbr.rel (0) target = $region17
  $region16: #{discriminator_logits.1} parent=0 // pred_region
    _
  $region17: #{discriminator_logits.1} parent=0 // pred_fallthru
    _
  // Predicated region
  $region18: #{discriminator_logits.1} parent=0 // pred_check
    _
  $region19: #{discriminator_logits.1} parent=0 // pred_check_branch
    %19 = sbr.rel (0) target = $region21
  $region20: #{discriminator_logits.1} parent=0 // pred_region
    _
  $region21: #{discriminator_logits.1} parent=0 // pred_fallthru
    _
  %v21 = vld [vmem:[%s0] sm:$0x3]
  %v22 = vlaneseq
  %v23 = vand.u32 %v22, 127
  %v24 = vlaneseq
  %v25 = vshrl.u32 %v24, 7
  %v26 = vsub.s32 0, %v25
  %v27 = vrot.slane %v21, %v26
  %29 = vbcast.lane.b32.xlu0 %v27, 256
  %v30 = vpop.permute.xlu0 %29
  %v31 = vlaneseq
  %v32 = vshrl.u32 %v31, 7
  %v33 = vsub.s32 1, %v32
  %v34 = vrot.slane %v21, %v33
  %36 = vbcast.lane.b32.xlu0 %v34, 256
  %v37 = vpop.permute.xlu0 %36
  %vm38 = vcmp.eq.s32.totalorder %v23, %v30
  %vm39 = vcmp.eq.s32.totalorder %v23, %v37
  %v40 = vsel %vm38, 1, 0
  %v41 = vsel %vm39, 1, 0
  %v42 = vcvt.s32.f32 %v40
  %v43 = vcvt.s32.f32 %v41
  %v44 = vpack.c.bf16 %v43, %v42
  %v45 = vld [vmem:[%s1] sm:$0xf]
  %v46 = vld [vmem:[%s1 + $0x4] sm:$0xf]
  %v47 = vld [vmem:[%s1 + $0x8] sm:$0xf]
  %v48 = vld [vmem:[%s1 + $0xc] sm:$0xf]
  %v49 = vld [vmem:[%s1 + $0x10] sm:$0xf]
  %v50 = vld [vmem:[%s1 + $0x14] sm:$0xf]
  %v51 = vld [vmem:[%s1 + $0x18] sm:$0xf]
  %v52 = vld [vmem:[%s1 + $0x1c] sm:$0xf]
  %v53 = vld [vmem:[%s1 + $0x20] sm:$0xf]
  %v54 = vld [vmem:[%s1 + $0x24] sm:$0xf]
  %v55 = vld [vmem:[%s1 + $0x28] sm:$0xf]
  %v56 = vld [vmem:[%s1 + $0x2c] sm:$0xf]
  %v57 = vld [vmem:[%s1 + $0x30] sm:$0xf]
  %v58 = vld [vmem:[%s1 + $0x34] sm:$0xf]
  %v59 = vld [vmem:[%s1 + $0x38] sm:$0xf]
  %v60 = vld [vmem:[%s1 + $0x3c] sm:$0xf]
  %v77 = vunpack.c.l.b16 %v45
  %v78 = vunpack.c.l.b16 %v46
  %v79 = vunpack.c.l.b16 %v47
  %v80 = vunpack.c.l.b16 %v48
  %v81 = vunpack.c.l.b16 %v49
  %v82 = vunpack.c.l.b16 %v50
  %v83 = vunpack.c.l.b16 %v51
  %v84 = vunpack.c.l.b16 %v52
  %v85 = vunpack.c.l.b16 %v53
  %v86 = vunpack.c.l.b16 %v54
  %v87 = vunpack.c.l.b16 %v55
  %v88 = vunpack.c.l.b16 %v56
  %v89 = vunpack.c.l.b16 %v57
  %v90 = vunpack.c.l.b16 %v58
  %v91 = vunpack.c.l.b16 %v59
  %v92 = vunpack.c.l.b16 %v60
  %v93 = vpack.c.b16 %v78, %v77
  %v94 = vpack.c.b16 %v80, %v79
  %v95 = vpack.c.b16 %v82, %v81
  %v96 = vpack.c.b16 %v84, %v83
  %v97 = vpack.c.b16 %v86, %v85
  %v98 = vpack.c.b16 %v88, %v87
  %v99 = vpack.c.b16 %v90, %v89
  %v100 = vpack.c.b16 %v92, %v91
  %109 = vmatprep.subr.bf16.mxu0 0
  %110 = vmatpush1.bf16.msra.mxu0 %v100
  %111 = vmatprep.subr.bf16.mxu0 0
  %112 = vmatpush1.bf16.msra.mxu0 %v99
  %113 = vmatprep.subr.bf16.mxu0 0
  %114 = vmatpush1.bf16.msra.mxu0 %v98
  %115 = vmatprep.subr.bf16.mxu0 0
  %116 = vmatpush1.bf16.msra.mxu0 %v97
  %117 = vmatprep.subr.bf16.mxu0 0
  %118 = vmatpush1.bf16.msra.mxu0 %v96
  %119 = vmatprep.subr.bf16.mxu0 0
  %120 = vmatpush1.bf16.msra.mxu0 %v95
  %121 = vmatprep.subr.bf16.mxu0 0
  %122 = vmatpush1.bf16.msra.mxu0 %v94
  %123 = vmatprep.subr.bf16.mxu0 0
  %124 = vmatpush1.bf16.msra.mxu0 %v93
  %125 = vmatprep.subr.bf16.mxu0 0
  %126 = vmatpush2.bf16.msra.mxu0 0
  %127 = vmatprep.subr.bf16.mxu0 0
  %128 = vmatpush2.bf16.msra.mxu0 0
  %129 = vmatprep.subr.bf16.mxu0 0
  %130 = vmatpush2.bf16.msra.mxu0 0
  %131 = vmatprep.subr.bf16.mxu0 0
  %132 = vmatpush2.bf16.msra.mxu0 0
  %133 = vmatprep.subr.bf16.mxu0 0
  %134 = vmatpush2.bf16.msra.mxu0 0
  %135 = vmatprep.subr.bf16.mxu0 0
  %136 = vmatpush2.bf16.msra.mxu0 0
  %137 = vmatprep.subr.bf16.mxu0 0
  %138 = vmatpush2.bf16.msra.mxu0 0
  %139 = vmatprep.subr.bf16.mxu0 0
  %140 = vmatpush2.bf16.msra.mxu0 0
  %141 = vmatprep.mubr.bf16.mxu0 0
  %142 = vmatmul.mubr.bf16.gmra.mxu0 %v44
  %v143 = vpop.f32.mrf.mxu0
  %v144 = vadd.f32 0.0, %v143
  %v145 = vpop.f32.mrf.mxu0
  %v146 = vpop.f32.mrf.mxu0
  %v147 = vadd.f32 0.0, %v146
  %v148 = vpop.f32.mrf.mxu0
  %149 = vdwg.mxu0
  %v150 = vld [vmem:[%s4 + $0x8] sm:$0xff]
  %v151 = vadd.f32 %v144, %v150
  %v152 = vadd.f32 %v147, %v150
  %v153 = vpack.c.bf16 %v152, %v151
  %v154 = vld [vmem:[%s2] sm:$0xf]
  %v155 = vld [vmem:[%s2 + $0x4] sm:$0xf]
  %v156 = vld [vmem:[%s2 + $0x8] sm:$0xf]
  %v157 = vld [vmem:[%s2 + $0xc] sm:$0xf]
  %v162 = vunpack.c.l.b16 %v154
  %v163 = vunpack.c.l.b16 %v155
  %v164 = vunpack.c.l.b16 %v156
  %v165 = vunpack.c.l.b16 %v157
  %v166 = vpack.c.b16 %v163, %v162
  %v167 = vpack.c.b16 %v165, %v164
  %vm170 = vcmask 261120
  %v172 = vsel %vm170, %v153, 0
  %174 = vmatprep.subr.bf16.mxu0 0
  %175 = vmatpush1.bf16.msra.mxu0 0
  %176 = vmatprep.subr.bf16.mxu0 0
  %177 = vmatpush1.bf16.msra.mxu0 0
  %178 = vmatprep.subr.bf16.mxu0 0
  %179 = vmatpush1.bf16.msra.mxu0 0
  %180 = vmatprep.subr.bf16.mxu0 0
  %181 = vmatpush1.bf16.msra.mxu0 0
  %182 = vmatprep.subr.bf16.mxu0 0
  %183 = vmatpush1.bf16.msra.mxu0 0
  %184 = vmatprep.subr.bf16.mxu0 0
  %185 = vmatpush1.bf16.msra.mxu0 0
  %186 = vmatprep.subr.bf16.mxu0 0
  %187 = vmatpush1.bf16.msra.mxu0 %v167
  %188 = vmatprep.subr.bf16.mxu0 0
  %189 = vmatpush1.bf16.msra.mxu0 %v166
  %190 = vmatprep.subr.bf16.mxu0 0
  %191 = vmatpush2.bf16.msra.mxu0 0
  %192 = vmatprep.subr.bf16.mxu0 0
  %193 = vmatpush2.bf16.msra.mxu0 0
  %194 = vmatprep.subr.bf16.mxu0 0
  %195 = vmatpush2.bf16.msra.mxu0 0
  %196 = vmatprep.subr.bf16.mxu0 0
  %197 = vmatpush2.bf16.msra.mxu0 0
  %198 = vmatprep.subr.bf16.mxu0 0
  %199 = vmatpush2.bf16.msra.mxu0 0
  %200 = vmatprep.subr.bf16.mxu0 0
  %201 = vmatpush2.bf16.msra.mxu0 0
  %202 = vmatprep.subr.bf16.mxu0 0
  %203 = vmatpush2.bf16.msra.mxu0 0
  %204 = vmatprep.subr.bf16.mxu0 0
  %205 = vmatpush2.bf16.msra.mxu0 0
  %206 = vmatprep.mubr.bf16.mxu0 0
  %207 = vmatmul.mubr.bf16.gmra.mxu0 %v172
  %v208 = vpop.f32.mrf.mxu0
  %v209 = vadd.f32 0.0, %v208
  %v210 = vpop.f32.mrf.mxu0
  %v211 = vpop.f32.mrf.mxu0
  %v212 = vadd.f32 0.0, %v211
  %v213 = vpop.f32.mrf.mxu0
  %214 = vdwg.mxu0
  %216 = vrot.lane.b32.xlu0 %v209, 96
  %v217 = vpop.permute.xlu0 %216
  %vm218 = vcmask 64512
  %v219 = vsel %vm218, %v209, 0
  %v221 = vsel %vm218, %v217, 0
  %223 = vmatprep.subr.mxu0 0.0
  %224 = vmatpush1.xpose.msra.mxu0 0.0
  %225 = vmatprep.subr.mxu0 0.0
  %226 = vmatpush1.xpose.msra.mxu0 0.0
  %227 = vmatprep.subr.mxu0 0.0
  %228 = vmatpush1.xpose.msra.mxu0 0.0
  %229 = vmatprep.subr.mxu0 0.0
  %230 = vmatpush1.xpose.msra.mxu0 0.0
  %231 = vmatprep.subr.mxu0 0.0
  %232 = vmatpush1.xpose.msra.mxu0 0.0
  %233 = vmatprep.subr.mxu0 0.0
  %234 = vmatpush1.xpose.msra.mxu0 0.0
  %235 = vmatprep.subr.mxu0 0.0
  %236 = vmatpush1.xpose.msra.mxu0 0.0
  %237 = vmatprep.subr.mxu0 0.0
  %238 = vmatpush1.xpose.msra.mxu0 0.0
  %239 = vmatprep.subr.mxu0 0.0
  %240 = vmatpush1.xpose.msra.mxu0 0.0
  %241 = vmatprep.subr.mxu0 0.0
  %242 = vmatpush1.xpose.msra.mxu0 0.0
  %243 = vmatprep.subr.mxu0 0.0
  %244 = vmatpush1.xpose.msra.mxu0 0.0
  %245 = vmatprep.subr.mxu0 0.0
  %246 = vmatpush1.xpose.msra.mxu0 0.0
  %247 = vmatprep.subr.mxu0 0.0
  %248 = vmatpush1.xpose.msra.mxu0 0.0
  %249 = vmatprep.subr.mxu0 0.0
  %250 = vmatpush1.xpose.msra.mxu0 0.0
  %251 = vmatprep.subr.mxu0 0.0
  %252 = vmatpush1.xpose.msra.mxu0 0.0
  %253 = vmatprep.subr.mxu0 0.0
  %254 = vmatpush1.xpose.msra.mxu0 %v221
  %255 = vmatprep.subr.mxu0 0.0
  %256 = vmatpush2.xpose.msra.mxu0 0.0
  %257 = vmatprep.subr.mxu0 0.0
  %258 = vmatpush2.xpose.msra.mxu0 0.0
  %259 = vmatprep.subr.mxu0 0.0
  %260 = vmatpush2.xpose.msra.mxu0 0.0
  %261 = vmatprep.subr.mxu0 0.0
  %262 = vmatpush2.xpose.msra.mxu0 0.0
  %263 = vmatprep.subr.mxu0 0.0
  %264 = vmatpush2.xpose.msra.mxu0 0.0
  %265 = vmatprep.subr.mxu0 0.0
  %266 = vmatpush2.xpose.msra.mxu0 0.0
  %267 = vmatprep.subr.mxu0 0.0
  %268 = vmatpush2.xpose.msra.mxu0 0.0
  %269 = vmatprep.subr.mxu0 0.0
  %270 = vmatpush2.xpose.msra.mxu0 0.0
  %271 = vmatprep.subr.mxu0 0.0
  %272 = vmatpush2.xpose.msra.mxu0 0.0
  %273 = vmatprep.subr.mxu0 0.0
  %274 = vmatpush2.xpose.msra.mxu0 0.0
  %275 = vmatprep.subr.mxu0 0.0
  %276 = vmatpush2.xpose.msra.mxu0 0.0
  %277 = vmatprep.subr.mxu0 0.0
  %278 = vmatpush2.xpose.msra.mxu0 0.0
  %279 = vmatprep.subr.mxu0 0.0
  %280 = vmatpush2.xpose.msra.mxu0 0.0
  %281 = vmatprep.subr.mxu0 0.0
  %282 = vmatpush2.xpose.msra.mxu0 0.0
  %283 = vmatprep.subr.mxu0 0.0
  %284 = vmatpush2.xpose.msra.mxu0 0.0
  %285 = vmatprep.subr.mxu0 0.0
  %286 = vmatpush2.xpose.msra.mxu0 0.0
  %287 = vmatprep.mubr.f32.mxu0 0.0
  %288 = vmatmul.mubr.f32.gmra.mxu0 %v219
  %v289 = vpop.f32.mrf.mxu0
  %v290 = vadd.f32 0.0, %v289
  %v291 = vpop.f32.mrf.mxu0
  %292 = vdwg.mxu0
  %294 = vrot.lane.b32.xlu0 %v212, 96
  %v295 = vpop.permute.xlu0 %294
  %v296 = vsel %vm218, %v212, 0
  %v298 = vsel %vm218, %v295, 0
  %300 = vmatprep.subr.mxu0 0.0
  %301 = vmatpush1.xpose.msra.mxu0 0.0
  %302 = vmatprep.subr.mxu0 0.0
  %303 = vmatpush1.xpose.msra.mxu0 0.0
  %304 = vmatprep.subr.mxu0 0.0
  %305 = vmatpush1.xpose.msra.mxu0 0.0
  %306 = vmatprep.subr.mxu0 0.0
  %307 = vmatpush1.xpose.msra.mxu0 0.0
  %308 = vmatprep.subr.mxu0 0.0
  %309 = vmatpush1.xpose.msra.mxu0 0.0
  %310 = vmatprep.subr.mxu0 0.0
  %311 = vmatpush1.xpose.msra.mxu0 0.0
  %312 = vmatprep.subr.mxu0 0.0
  %313 = vmatpush1.xpose.msra.mxu0 0.0
  %314 = vmatprep.subr.mxu0 0.0
  %315 = vmatpush1.xpose.msra.mxu0 0.0
  %316 = vmatprep.subr.mxu0 0.0
  %317 = vmatpush1.xpose.msra.mxu0 0.0
  %318 = vmatprep.subr.mxu0 0.0
  %319 = vmatpush1.xpose.msra.mxu0 0.0
  %320 = vmatprep.subr.mxu0 0.0
  %321 = vmatpush1.xpose.msra.mxu0 0.0
  %322 = vmatprep.subr.mxu0 0.0
  %323 = vmatpush1.xpose.msra.mxu0 0.0
  %324 = vmatprep.subr.mxu0 0.0
  %325 = vmatpush1.xpose.msra.mxu0 0.0
  %326 = vmatprep.subr.mxu0 0.0
  %327 = vmatpush1.xpose.msra.mxu0 0.0
  %328 = vmatprep.subr.mxu0 0.0
  %329 = vmatpush1.xpose.msra.mxu0 0.0
  %330 = vmatprep.subr.mxu0 0.0
  %331 = vmatpush1.xpose.msra.mxu0 %v298
  %332 = vmatprep.subr.mxu0 0.0
  %333 = vmatpush2.xpose.msra.mxu0 0.0
  %334 = vmatprep.subr.mxu0 0.0
  %335 = vmatpush2.xpose.msra.mxu0 0.0
  %336 = vmatprep.subr.mxu0 0.0
  %337 = vmatpush2.xpose.msra.mxu0 0.0
  %338 = vmatprep.subr.mxu0 0.0
  %339 = vmatpush2.xpose.msra.mxu0 0.0
  %340 = vmatprep.subr.mxu0 0.0
  %341 = vmatpush2.xpose.msra.mxu0 0.0
  %342 = vmatprep.subr.mxu0 0.0
  %343 = vmatpush2.xpose.msra.mxu0 0.0
  %344 = vmatprep.subr.mxu0 0.0
  %345 = vmatpush2.xpose.msra.mxu0 0.0
  %346 = vmatprep.subr.mxu0 0.0
  %347 = vmatpush2.xpose.msra.mxu0 0.0
  %348 = vmatprep.subr.mxu0 0.0
  %349 = vmatpush2.xpose.msra.mxu0 0.0
  %350 = vmatprep.subr.mxu0 0.0
  %351 = vmatpush2.xpose.msra.mxu0 0.0
  %352 = vmatprep.subr.mxu0 0.0
  %353 = vmatpush2.xpose.msra.mxu0 0.0
  %354 = vmatprep.subr.mxu0 0.0
  %355 = vmatpush2.xpose.msra.mxu0 0.0
  %356 = vmatprep.subr.mxu0 0.0
  %357 = vmatpush2.xpose.msra.mxu0 0.0
  %358 = vmatprep.subr.mxu0 0.0
  %359 = vmatpush2.xpose.msra.mxu0 0.0
  %360 = vmatprep.subr.mxu0 0.0
  %361 = vmatpush2.xpose.msra.mxu0 0.0
  %362 = vmatprep.subr.mxu0 0.0
  %363 = vmatpush2.xpose.msra.mxu0 0.0
  %364 = vmatprep.mubr.f32.mxu0 0.0
  %365 = vmatmul.mubr.f32.gmra.mxu0 %v296
  %v366 = vpop.f32.mrf.mxu0
  %v367 = vadd.f32 0.0, %v366
  %v368 = vpop.f32.mrf.mxu0
  %369 = vdwg.mxu0
  %v370 = vsel %vm218, %v290, -inf
  %371 = vmax.xlane.f32.xlu0 %v370
  %v372 = vpop.xlane.xlu0 %371
  %v373 = vsel %vm218, %v367, -inf
  %374 = vmax.xlane.f32.xlu0 %v373
  %v375 = vpop.xlane.xlu0 %374
  %v376 = vsub.f32 %v290, %v372
  %v377 = vsub.f32 %v367, %v375
  %v378 = vmul.f32 %v376, 1.442695
  %v379 = vpow.pop %v378
  %v380 = vmul.f32 %v377, 1.442695
  %v381 = vpow.pop %v380
  %v382 = vsel %vm218, %v379, 0.0
  %383 = vadd.xlane.f32.xlu0 %v382
  %v384 = vpop.xlane.xlu0 %383
  %v385 = vsel %vm218, %v381, 0.0
  %386 = vadd.xlane.f32.xlu0 %v385
  %v387 = vpop.xlane.xlu0 %386
  %v388 = vrcp.pop %v384
  %v389 = vrcp.pop %v387
  %v390 = vmul.f32 %v379, %v388
  %v391 = vmul.f32 %v381, %v389
  %392 = vrot.lane.b32.xlu0 %v209, 64
  %v393 = vpop.permute.xlu0 %392
  %v396 = vsel %vm218, %v390, 0
  %398 = vmatprep.subr.mxu0 0.0
  %399 = vmatpush1.msra.mxu0 0.0
  %400 = vmatprep.subr.mxu0 0.0
  %401 = vmatpush1.msra.mxu0 0.0
  %402 = vmatprep.subr.mxu0 0.0
  %403 = vmatpush1.msra.mxu0 0.0
  %404 = vmatprep.subr.mxu0 0.0
  %405 = vmatpush1.msra.mxu0 0.0
  %406 = vmatprep.subr.mxu0 0.0
  %407 = vmatpush1.msra.mxu0 0.0
  %408 = vmatprep.subr.mxu0 0.0
  %409 = vmatpush1.msra.mxu0 0.0
  %410 = vmatprep.subr.mxu0 0.0
  %411 = vmatpush1.msra.mxu0 0.0
  %412 = vmatprep.subr.mxu0 0.0
  %413 = vmatpush1.msra.mxu0 0.0
  %414 = vmatprep.subr.mxu0 0.0
  %415 = vmatpush1.msra.mxu0 0.0
  %416 = vmatprep.subr.mxu0 0.0
  %417 = vmatpush1.msra.mxu0 0.0
  %418 = vmatprep.subr.mxu0 0.0
  %419 = vmatpush1.msra.mxu0 0.0
  %420 = vmatprep.subr.mxu0 0.0
  %421 = vmatpush1.msra.mxu0 0.0
  %422 = vmatprep.subr.mxu0 0.0
  %423 = vmatpush1.msra.mxu0 0.0
  %424 = vmatprep.subr.mxu0 0.0
  %425 = vmatpush1.msra.mxu0 0.0
  %426 = vmatprep.subr.mxu0 0.0
  %427 = vmatpush1.msra.mxu0 0.0
  %428 = vmatprep.subr.mxu0 0.0
  %429 = vmatpush1.msra.mxu0 %v393
  %430 = vmatprep.subr.mxu0 0.0
  %431 = vmatpush2.msra.mxu0 0.0
  %432 = vmatprep.subr.mxu0 0.0
  %433 = vmatpush2.msra.mxu0 0.0
  %434 = vmatprep.subr.mxu0 0.0
  %435 = vmatpush2.msra.mxu0 0.0
  %436 = vmatprep.subr.mxu0 0.0
  %437 = vmatpush2.msra.mxu0 0.0
  %438 = vmatprep.subr.mxu0 0.0
  %439 = vmatpush2.msra.mxu0 0.0
  %440 = vmatprep.subr.mxu0 0.0
  %441 = vmatpush2.msra.mxu0 0.0
  %442 = vmatprep.subr.mxu0 0.0
  %443 = vmatpush2.msra.mxu0 0.0
  %444 = vmatprep.subr.mxu0 0.0
  %445 = vmatpush2.msra.mxu0 0.0
  %446 = vmatprep.subr.mxu0 0.0
  %447 = vmatpush2.msra.mxu0 0.0
  %448 = vmatprep.subr.mxu0 0.0
  %449 = vmatpush2.msra.mxu0 0.0
  %450 = vmatprep.subr.mxu0 0.0
  %451 = vmatpush2.msra.mxu0 0.0
  %452 = vmatprep.subr.mxu0 0.0
  %453 = vmatpush2.msra.mxu0 0.0
  %454 = vmatprep.subr.mxu0 0.0
  %455 = vmatpush2.msra.mxu0 0.0
  %456 = vmatprep.subr.mxu0 0.0
  %457 = vmatpush2.msra.mxu0 0.0
  %458 = vmatprep.subr.mxu0 0.0
  %459 = vmatpush2.msra.mxu0 0.0
  %460 = vmatprep.subr.mxu0 0.0
  %461 = vmatpush2.msra.mxu0 0.0
  %462 = vmatprep.mubr.f32.mxu0 0.0
  %463 = vmatmul.mubr.f32.gmra.mxu0 %v396
  %v464 = vpop.f32.mrf.mxu0
  %v465 = vadd.f32 0.0, %v464
  %v466 = vpop.f32.mrf.mxu0
  %467 = vdwg.mxu0
  %468 = vrot.lane.b32.xlu0 %v212, 64
  %v469 = vpop.permute.xlu0 %468
  %v472 = vsel %vm218, %v391, 0
  %474 = vmatprep.subr.mxu0 0.0
  %475 = vmatpush1.msra.mxu0 0.0
  %476 = vmatprep.subr.mxu0 0.0
  %477 = vmatpush1.msra.mxu0 0.0
  %478 = vmatprep.subr.mxu0 0.0
  %479 = vmatpush1.msra.mxu0 0.0
  %480 = vmatprep.subr.mxu0 0.0
  %481 = vmatpush1.msra.mxu0 0.0
  %482 = vmatprep.subr.mxu0 0.0
  %483 = vmatpush1.msra.mxu0 0.0
  %484 = vmatprep.subr.mxu0 0.0
  %485 = vmatpush1.msra.mxu0 0.0
  %486 = vmatprep.subr.mxu0 0.0
  %487 = vmatpush1.msra.mxu0 0.0
  %488 = vmatprep.subr.mxu0 0.0
  %489 = vmatpush1.msra.mxu0 0.0
  %490 = vmatprep.subr.mxu0 0.0
  %491 = vmatpush1.msra.mxu0 0.0
  %492 = vmatprep.subr.mxu0 0.0
  %493 = vmatpush1.msra.mxu0 0.0
  %494 = vmatprep.subr.mxu0 0.0
  %495 = vmatpush1.msra.mxu0 0.0
  %496 = vmatprep.subr.mxu0 0.0
  %497 = vmatpush1.msra.mxu0 0.0
  %498 = vmatprep.subr.mxu0 0.0
  %499 = vmatpush1.msra.mxu0 0.0
  %500 = vmatprep.subr.mxu0 0.0
  %501 = vmatpush1.msra.mxu0 0.0
  %502 = vmatprep.subr.mxu0 0.0
  %503 = vmatpush1.msra.mxu0 0.0
  %504 = vmatprep.subr.mxu0 0.0
  %505 = vmatpush1.msra.mxu0 %v469
  %506 = vmatprep.subr.mxu0 0.0
  %507 = vmatpush2.msra.mxu0 0.0
  %508 = vmatprep.subr.mxu0 0.0
  %509 = vmatpush2.msra.mxu0 0.0
  %510 = vmatprep.subr.mxu0 0.0
  %511 = vmatpush2.msra.mxu0 0.0
  %512 = vmatprep.subr.mxu0 0.0
  %513 = vmatpush2.msra.mxu0 0.0
  %514 = vmatprep.subr.mxu0 0.0
  %515 = vmatpush2.msra.mxu0 0.0
  %516 = vmatprep.subr.mxu0 0.0
  %517 = vmatpush2.msra.mxu0 0.0
  %518 = vmatprep.subr.mxu0 0.0
  %519 = vmatpush2.msra.mxu0 0.0
  %520 = vmatprep.subr.mxu0 0.0
  %521 = vmatpush2.msra.mxu0 0.0
  %522 = vmatprep.subr.mxu0 0.0
  %523 = vmatpush2.msra.mxu0 0.0
  %524 = vmatprep.subr.mxu0 0.0
  %525 = vmatpush2.msra.mxu0 0.0
  %526 = vmatprep.subr.mxu0 0.0
  %527 = vmatpush2.msra.mxu0 0.0
  %528 = vmatprep.subr.mxu0 0.0
  %529 = vmatpush2.msra.mxu0 0.0
  %530 = vmatprep.subr.mxu0 0.0
  %531 = vmatpush2.msra.mxu0 0.0
  %532 = vmatprep.subr.mxu0 0.0
  %533 = vmatpush2.msra.mxu0 0.0
  %534 = vmatprep.subr.mxu0 0.0
  %535 = vmatpush2.msra.mxu0 0.0
  %536 = vmatprep.subr.mxu0 0.0
  %537 = vmatpush2.msra.mxu0 0.0
  %538 = vmatprep.mubr.f32.mxu0 0.0
  %539 = vmatmul.mubr.f32.gmra.mxu0 %v472
  %v540 = vpop.f32.mrf.mxu0
  %v541 = vadd.f32 0.0, %v540
  %v542 = vpop.f32.mrf.mxu0
  %543 = vdwg.mxu0
  %544 = vrot.lane.b32.xlu0 %v209, 120
  %v545 = vpop.permute.xlu0 %544
  %546 = vrot.lane.b32.xlu0 %v209, 88
  %v547 = vpop.permute.xlu0 %546
  %v548 = vsel %vm218, %v545, 0
  %v550 = vsel %vm218, %v547, 0
  %552 = vmatprep.subr.mxu0 0.0
  %553 = vmatpush1.xpose.msra.mxu0 0.0
  %554 = vmatprep.subr.mxu0 0.0
  %555 = vmatpush1.xpose.msra.mxu0 0.0
  %556 = vmatprep.subr.mxu0 0.0
  %557 = vmatpush1.xpose.msra.mxu0 0.0
  %558 = vmatprep.subr.mxu0 0.0
  %559 = vmatpush1.xpose.msra.mxu0 0.0
  %560 = vmatprep.subr.mxu0 0.0
  %561 = vmatpush1.xpose.msra.mxu0 0.0
  %562 = vmatprep.subr.mxu0 0.0
  %563 = vmatpush1.xpose.msra.mxu0 0.0
  %564 = vmatprep.subr.mxu0 0.0
  %565 = vmatpush1.xpose.msra.mxu0 0.0
  %566 = vmatprep.subr.mxu0 0.0
  %567 = vmatpush1.xpose.msra.mxu0 0.0
  %568 = vmatprep.subr.mxu0 0.0
  %569 = vmatpush1.xpose.msra.mxu0 0.0
  %570 = vmatprep.subr.mxu0 0.0
  %571 = vmatpush1.xpose.msra.mxu0 0.0
  %572 = vmatprep.subr.mxu0 0.0
  %573 = vmatpush1.xpose.msra.mxu0 0.0
  %574 = vmatprep.subr.mxu0 0.0
  %575 = vmatpush1.xpose.msra.mxu0 0.0
  %576 = vmatprep.subr.mxu0 0.0
  %577 = vmatpush1.xpose.msra.mxu0 0.0
  %578 = vmatprep.subr.mxu0 0.0
  %579 = vmatpush1.xpose.msra.mxu0 0.0
  %580 = vmatprep.subr.mxu0 0.0
  %581 = vmatpush1.xpose.msra.mxu0 0.0
  %582 = vmatprep.subr.mxu0 0.0
  %583 = vmatpush1.xpose.msra.mxu0 %v550
  %584 = vmatprep.subr.mxu0 0.0
  %585 = vmatpush2.xpose.msra.mxu0 0.0
  %586 = vmatprep.subr.mxu0 0.0
  %587 = vmatpush2.xpose.msra.mxu0 0.0
  %588 = vmatprep.subr.mxu0 0.0
  %589 = vmatpush2.xpose.msra.mxu0 0.0
  %590 = vmatprep.subr.mxu0 0.0
  %591 = vmatpush2.xpose.msra.mxu0 0.0
  %592 = vmatprep.subr.mxu0 0.0
  %593 = vmatpush2.xpose.msra.mxu0 0.0
  %594 = vmatprep.subr.mxu0 0.0
  %595 = vmatpush2.xpose.msra.mxu0 0.0
  %596 = vmatprep.subr.mxu0 0.0
  %597 = vmatpush2.xpose.msra.mxu0 0.0
  %598 = vmatprep.subr.mxu0 0.0
  %599 = vmatpush2.xpose.msra.mxu0 0.0
  %600 = vmatprep.subr.mxu0 0.0
  %601 = vmatpush2.xpose.msra.mxu0 0.0
  %602 = vmatprep.subr.mxu0 0.0
  %603 = vmatpush2.xpose.msra.mxu0 0.0
  %604 = vmatprep.subr.mxu0 0.0
  %605 = vmatpush2.xpose.msra.mxu0 0.0
  %606 = vmatprep.subr.mxu0 0.0
  %607 = vmatpush2.xpose.msra.mxu0 0.0
  %608 = vmatprep.subr.mxu0 0.0
  %609 = vmatpush2.xpose.msra.mxu0 0.0
  %610 = vmatprep.subr.mxu0 0.0
  %611 = vmatpush2.xpose.msra.mxu0 0.0
  %612 = vmatprep.subr.mxu0 0.0
  %613 = vmatpush2.xpose.msra.mxu0 0.0
  %614 = vmatprep.subr.mxu0 0.0
  %615 = vmatpush2.xpose.msra.mxu0 0.0
  %616 = vmatprep.mubr.f32.mxu0 0.0
  %617 = vmatmul.mubr.f32.gmra.mxu0 %v548
  %v618 = vpop.f32.mrf.mxu0
  %v619 = vadd.f32 0.0, %v618
  %v620 = vpop.f32.mrf.mxu0
  %621 = vdwg.mxu0
  %622 = vrot.lane.b32.xlu0 %v212, 120
  %v623 = vpop.permute.xlu0 %622
  %624 = vrot.lane.b32.xlu0 %v212, 88
  %v625 = vpop.permute.xlu0 %624
  %v626 = vsel %vm218, %v623, 0
  %v628 = vsel %vm218, %v625, 0
  %630 = vmatprep.subr.mxu0 0.0
  %631 = vmatpush1.xpose.msra.mxu0 0.0
  %632 = vmatprep.subr.mxu0 0.0
  %633 = vmatpush1.xpose.msra.mxu0 0.0
  %634 = vmatprep.subr.mxu0 0.0
  %635 = vmatpush1.xpose.msra.mxu0 0.0
  %636 = vmatprep.subr.mxu0 0.0
  %637 = vmatpush1.xpose.msra.mxu0 0.0
  %638 = vmatprep.subr.mxu0 0.0
  %639 = vmatpush1.xpose.msra.mxu0 0.0
  %640 = vmatprep.subr.mxu0 0.0
  %641 = vmatpush1.xpose.msra.mxu0 0.0
  %642 = vmatprep.subr.mxu0 0.0
  %643 = vmatpush1.xpose.msra.mxu0 0.0
  %644 = vmatprep.subr.mxu0 0.0
  %645 = vmatpush1.xpose.msra.mxu0 0.0
  %646 = vmatprep.subr.mxu0 0.0
  %647 = vmatpush1.xpose.msra.mxu0 0.0
  %648 = vmatprep.subr.mxu0 0.0
  %649 = vmatpush1.xpose.msra.mxu0 0.0
  %650 = vmatprep.subr.mxu0 0.0
  %651 = vmatpush1.xpose.msra.mxu0 0.0
  %652 = vmatprep.subr.mxu0 0.0
  %653 = vmatpush1.xpose.msra.mxu0 0.0
  %654 = vmatprep.subr.mxu0 0.0
  %655 = vmatpush1.xpose.msra.mxu0 0.0
  %656 = vmatprep.subr.mxu0 0.0
  %657 = vmatpush1.xpose.msra.mxu0 0.0
  %658 = vmatprep.subr.mxu0 0.0
  %659 = vmatpush1.xpose.msra.mxu0 0.0
  %660 = vmatprep.subr.mxu0 0.0
  %661 = vmatpush1.xpose.msra.mxu0 %v628
  %662 = vmatprep.subr.mxu0 0.0
  %663 = vmatpush2.xpose.msra.mxu0 0.0
  %664 = vmatprep.subr.mxu0 0.0
  %665 = vmatpush2.xpose.msra.mxu0 0.0
  %666 = vmatprep.subr.mxu0 0.0
  %667 = vmatpush2.xpose.msra.mxu0 0.0
  %668 = vmatprep.subr.mxu0 0.0
  %669 = vmatpush2.xpose.msra.mxu0 0.0
  %670 = vmatprep.subr.mxu0 0.0
  %671 = vmatpush2.xpose.msra.mxu0 0.0
  %672 = vmatprep.subr.mxu0 0.0
  %673 = vmatpush2.xpose.msra.mxu0 0.0
  %674 = vmatprep.subr.mxu0 0.0
  %675 = vmatpush2.xpose.msra.mxu0 0.0
  %676 = vmatprep.subr.mxu0 0.0
  %677 = vmatpush2.xpose.msra.mxu0 0.0
  %678 = vmatprep.subr.mxu0 0.0
  %679 = vmatpush2.xpose.msra.mxu0 0.0
  %680 = vmatprep.subr.mxu0 0.0
  %681 = vmatpush2.xpose.msra.mxu0 0.0
  %682 = vmatprep.subr.mxu0 0.0
  %683 = vmatpush2.xpose.msra.mxu0 0.0
  %684 = vmatprep.subr.mxu0 0.0
  %685 = vmatpush2.xpose.msra.mxu0 0.0
  %686 = vmatprep.subr.mxu0 0.0
  %687 = vmatpush2.xpose.msra.mxu0 0.0
  %688 = vmatprep.subr.mxu0 0.0
  %689 = vmatpush2.xpose.msra.mxu0 0.0
  %690 = vmatprep.subr.mxu0 0.0
  %691 = vmatpush2.xpose.msra.mxu0 0.0
  %692 = vmatprep.subr.mxu0 0.0
  %693 = vmatpush2.xpose.msra.mxu0 0.0
  %694 = vmatprep.mubr.f32.mxu0 0.0
  %695 = vmatmul.mubr.f32.gmra.mxu0 %v626
  %v696 = vpop.f32.mrf.mxu0
  %v697 = vadd.f32 0.0, %v696
  %v698 = vpop.f32.mrf.mxu0
  %699 = vdwg.mxu0
  %v700 = vsel %vm218, %v619, -inf
  %701 = vmax.xlane.f32.xlu0 %v700
  %v702 = vpop.xlane.xlu0 %701
  %v703 = vsel %vm218, %v697, -inf
  %704 = vmax.xlane.f32.xlu0 %v703
  %v705 = vpop.xlane.xlu0 %704
  %v706 = vsub.f32 %v619, %v702
  %v707 = vsub.f32 %v697, %v705
  %v708 = vmul.f32 %v706, 1.442695
  %v709 = vpow.pop %v708
  %v710 = vmul.f32 %v707, 1.442695
  %v711 = vpow.pop %v710
  %v712 = vsel %vm218, %v709, 0.0
  %713 = vadd.xlane.f32.xlu0 %v712
  %v714 = vpop.xlane.xlu0 %713
  %v715 = vsel %vm218, %v711, 0.0
  %716 = vadd.xlane.f32.xlu0 %v715
  %v717 = vpop.xlane.xlu0 %716
  %v718 = vrcp.pop %v714
  %v719 = vrcp.pop %v717
  %v720 = vmul.f32 %v709, %v718
  %v721 = vmul.f32 %v711, %v719
  %722 = vrot.lane.b32.xlu0 %v209, 56
  %v723 = vpop.permute.xlu0 %722
  %v726 = vsel %vm218, %v720, 0
  %728 = vmatprep.subr.mxu0 0.0
  %729 = vmatpush1.msra.mxu0 0.0
  %730 = vmatprep.subr.mxu0 0.0
  %731 = vmatpush1.msra.mxu0 0.0
  %732 = vmatprep.subr.mxu0 0.0
  %733 = vmatpush1.msra.mxu0 0.0
  %734 = vmatprep.subr.mxu0 0.0
  %735 = vmatpush1.msra.mxu0 0.0
  %736 = vmatprep.subr.mxu0 0.0
  %737 = vmatpush1.msra.mxu0 0.0
  %738 = vmatprep.subr.mxu0 0.0
  %739 = vmatpush1.msra.mxu0 0.0
  %740 = vmatprep.subr.mxu0 0.0
  %741 = vmatpush1.msra.mxu0 0.0
  %742 = vmatprep.subr.mxu0 0.0
  %743 = vmatpush1.msra.mxu0 0.0
  %744 = vmatprep.subr.mxu0 0.0
  %745 = vmatpush1.msra.mxu0 0.0
  %746 = vmatprep.subr.mxu0 0.0
  %747 = vmatpush1.msra.mxu0 0.0
  %748 = vmatprep.subr.mxu0 0.0
  %749 = vmatpush1.msra.mxu0 0.0
  %750 = vmatprep.subr.mxu0 0.0
  %751 = vmatpush1.msra.mxu0 0.0
  %752 = vmatprep.subr.mxu0 0.0
  %753 = vmatpush1.msra.mxu0 0.0
  %754 = vmatprep.subr.mxu0 0.0
  %755 = vmatpush1.msra.mxu0 0.0
  %756 = vmatprep.subr.mxu0 0.0
  %757 = vmatpush1.msra.mxu0 0.0
  %758 = vmatprep.subr.mxu0 0.0
  %759 = vmatpush1.msra.mxu0 %v723
  %760 = vmatprep.subr.mxu0 0.0
  %761 = vmatpush2.msra.mxu0 0.0
  %762 = vmatprep.subr.mxu0 0.0
  %763 = vmatpush2.msra.mxu0 0.0
  %764 = vmatprep.subr.mxu0 0.0
  %765 = vmatpush2.msra.mxu0 0.0
  %766 = vmatprep.subr.mxu0 0.0
  %767 = vmatpush2.msra.mxu0 0.0
  %768 = vmatprep.subr.mxu0 0.0
  %769 = vmatpush2.msra.mxu0 0.0
  %770 = vmatprep.subr.mxu0 0.0
  %771 = vmatpush2.msra.mxu0 0.0
  %772 = vmatprep.subr.mxu0 0.0
  %773 = vmatpush2.msra.mxu0 0.0
  %774 = vmatprep.subr.mxu0 0.0
  %775 = vmatpush2.msra.mxu0 0.0
  %776 = vmatprep.subr.mxu0 0.0
  %777 = vmatpush2.msra.mxu0 0.0
  %778 = vmatprep.subr.mxu0 0.0
  %779 = vmatpush2.msra.mxu0 0.0
  %780 = vmatprep.subr.mxu0 0.0
  %781 = vmatpush2.msra.mxu0 0.0
  %782 = vmatprep.subr.mxu0 0.0
  %783 = vmatpush2.msra.mxu0 0.0
  %784 = vmatprep.subr.mxu0 0.0
  %785 = vmatpush2.msra.mxu0 0.0
  %786 = vmatprep.subr.mxu0 0.0
  %787 = vmatpush2.msra.mxu0 0.0
  %788 = vmatprep.subr.mxu0 0.0
  %789 = vmatpush2.msra.mxu0 0.0
  %790 = vmatprep.subr.mxu0 0.0
  %791 = vmatpush2.msra.mxu0 0.0
  %792 = vmatprep.mubr.f32.mxu0 0.0
  %793 = vmatmul.mubr.f32.gmra.mxu0 %v726
  %v794 = vpop.f32.mrf.mxu0
  %v795 = vadd.f32 0.0, %v794
  %v796 = vpop.f32.mrf.mxu0
  %797 = vdwg.mxu0
  %798 = vrot.lane.b32.xlu0 %v212, 56
  %v799 = vpop.permute.xlu0 %798
  %v802 = vsel %vm218, %v721, 0
  %804 = vmatprep.subr.mxu0 0.0
  %805 = vmatpush1.msra.mxu0 0.0
  %806 = vmatprep.subr.mxu0 0.0
  %807 = vmatpush1.msra.mxu0 0.0
  %808 = vmatprep.subr.mxu0 0.0
  %809 = vmatpush1.msra.mxu0 0.0
  %810 = vmatprep.subr.mxu0 0.0
  %811 = vmatpush1.msra.mxu0 0.0
  %812 = vmatprep.subr.mxu0 0.0
  %813 = vmatpush1.msra.mxu0 0.0
  %814 = vmatprep.subr.mxu0 0.0
  %815 = vmatpush1.msra.mxu0 0.0
  %816 = vmatprep.subr.mxu0 0.0
  %817 = vmatpush1.msra.mxu0 0.0
  %818 = vmatprep.subr.mxu0 0.0
  %819 = vmatpush1.msra.mxu0 0.0
  %820 = vmatprep.subr.mxu0 0.0
  %821 = vmatpush1.msra.mxu0 0.0
  %822 = vmatprep.subr.mxu0 0.0
  %823 = vmatpush1.msra.mxu0 0.0
  %824 = vmatprep.subr.mxu0 0.0
  %825 = vmatpush1.msra.mxu0 0.0
  %826 = vmatprep.subr.mxu0 0.0
  %827 = vmatpush1.msra.mxu0 0.0
  %828 = vmatprep.subr.mxu0 0.0
  %829 = vmatpush1.msra.mxu0 0.0
  %830 = vmatprep.subr.mxu0 0.0
  %831 = vmatpush1.msra.mxu0 0.0
  %832 = vmatprep.subr.mxu0 0.0
  %833 = vmatpush1.msra.mxu0 0.0
  %834 = vmatprep.subr.mxu0 0.0
  %835 = vmatpush1.msra.mxu0 %v799
  %836 = vmatprep.subr.mxu0 0.0
  %837 = vmatpush2.msra.mxu0 0.0
  %838 = vmatprep.subr.mxu0 0.0
  %839 = vmatpush2.msra.mxu0 0.0
  %840 = vmatprep.subr.mxu0 0.0
  %841 = vmatpush2.msra.mxu0 0.0
  %842 = vmatprep.subr.mxu0 0.0
  %843 = vmatpush2.msra.mxu0 0.0
  %844 = vmatprep.subr.mxu0 0.0
  %845 = vmatpush2.msra.mxu0 0.0
  %846 = vmatprep.subr.mxu0 0.0
  %847 = vmatpush2.msra.mxu0 0.0
  %848 = vmatprep.subr.mxu0 0.0
  %849 = vmatpush2.msra.mxu0 0.0
  %850 = vmatprep.subr.mxu0 0.0
  %851 = vmatpush2.msra.mxu0 0.0
  %852 = vmatprep.subr.mxu0 0.0
  %853 = vmatpush2.msra.mxu0 0.0
  %854 = vmatprep.subr.mxu0 0.0
  %855 = vmatpush2.msra.mxu0 0.0
  %856 = vmatprep.subr.mxu0 0.0
  %857 = vmatpush2.msra.mxu0 0.0
  %858 = vmatprep.subr.mxu0 0.0
  %859 = vmatpush2.msra.mxu0 0.0
  %860 = vmatprep.subr.mxu0 0.0
  %861 = vmatpush2.msra.mxu0 0.0
  %862 = vmatprep.subr.mxu0 0.0
  %863 = vmatpush2.msra.mxu0 0.0
  %864 = vmatprep.subr.mxu0 0.0
  %865 = vmatpush2.msra.mxu0 0.0
  %866 = vmatprep.subr.mxu0 0.0
  %867 = vmatpush2.msra.mxu0 0.0
  %868 = vmatprep.mubr.f32.mxu0 0.0
  %869 = vmatmul.mubr.f32.gmra.mxu0 %v802
  %v870 = vpop.f32.mrf.mxu0
  %v871 = vadd.f32 0.0, %v870
  %v872 = vpop.f32.mrf.mxu0
  %873 = vdwg.mxu0
  %874 = vrot.lane.b32.xlu0 %v209, 112
  %v875 = vpop.permute.xlu0 %874
  %876 = vrot.lane.b32.xlu0 %v209, 80
  %v877 = vpop.permute.xlu0 %876
  %v878 = vsel %vm218, %v875, 0
  %v880 = vsel %vm218, %v877, 0
  %882 = vmatprep.subr.mxu0 0.0
  %883 = vmatpush1.xpose.msra.mxu0 0.0
  %884 = vmatprep.subr.mxu0 0.0
  %885 = vmatpush1.xpose.msra.mxu0 0.0
  %886 = vmatprep.subr.mxu0 0.0
  %887 = vmatpush1.xpose.msra.mxu0 0.0
  %888 = vmatprep.subr.mxu0 0.0
  %889 = vmatpush1.xpose.msra.mxu0 0.0
  %890 = vmatprep.subr.mxu0 0.0
  %891 = vmatpush1.xpose.msra.mxu0 0.0
  %892 = vmatprep.subr.mxu0 0.0
  %893 = vmatpush1.xpose.msra.mxu0 0.0
  %894 = vmatprep.subr.mxu0 0.0
  %895 = vmatpush1.xpose.msra.mxu0 0.0
  %896 = vmatprep.subr.mxu0 0.0
  %897 = vmatpush1.xpose.msra.mxu0 0.0
  %898 = vmatprep.subr.mxu0 0.0
  %899 = vmatpush1.xpose.msra.mxu0 0.0
  %900 = vmatprep.subr.mxu0 0.0
  %901 = vmatpush1.xpose.msra.mxu0 0.0
  %902 = vmatprep.subr.mxu0 0.0
  %903 = vmatpush1.xpose.msra.mxu0 0.0
  %904 = vmatprep.subr.mxu0 0.0
  %905 = vmatpush1.xpose.msra.mxu0 0.0
  %906 = vmatprep.subr.mxu0 0.0
  %907 = vmatpush1.xpose.msra.mxu0 0.0
  %908 = vmatprep.subr.mxu0 0.0
  %909 = vmatpush1.xpose.msra.mxu0 0.0
  %910 = vmatprep.subr.mxu0 0.0
  %911 = vmatpush1.xpose.msra.mxu0 0.0
  %912 = vmatprep.subr.mxu0 0.0
  %913 = vmatpush1.xpose.msra.mxu0 %v880
  %914 = vmatprep.subr.mxu0 0.0
  %915 = vmatpush2.xpose.msra.mxu0 0.0
  %916 = vmatprep.subr.mxu0 0.0
  %917 = vmatpush2.xpose.msra.mxu0 0.0
  %918 = vmatprep.subr.mxu0 0.0
  %919 = vmatpush2.xpose.msra.mxu0 0.0
  %920 = vmatprep.subr.mxu0 0.0
  %921 = vmatpush2.xpose.msra.mxu0 0.0
  %922 = vmatprep.subr.mxu0 0.0
  %923 = vmatpush2.xpose.msra.mxu0 0.0
  %924 = vmatprep.subr.mxu0 0.0
  %925 = vmatpush2.xpose.msra.mxu0 0.0
  %926 = vmatprep.subr.mxu0 0.0
  %927 = vmatpush2.xpose.msra.mxu0 0.0
  %928 = vmatprep.subr.mxu0 0.0
  %929 = vmatpush2.xpose.msra.mxu0 0.0
  %930 = vmatprep.subr.mxu0 0.0
  %931 = vmatpush2.xpose.msra.mxu0 0.0
  %932 = vmatprep.subr.mxu0 0.0
  %933 = vmatpush2.xpose.msra.mxu0 0.0
  %934 = vmatprep.subr.mxu0 0.0
  %935 = vmatpush2.xpose.msra.mxu0 0.0
  %936 = vmatprep.subr.mxu0 0.0
  %937 = vmatpush2.xpose.msra.mxu0 0.0
  %938 = vmatprep.subr.mxu0 0.0
  %939 = vmatpush2.xpose.msra.mxu0 0.0
  %940 = vmatprep.subr.mxu0 0.0
  %941 = vmatpush2.xpose.msra.mxu0 0.0
  %942 = vmatprep.subr.mxu0 0.0
  %943 = vmatpush2.xpose.msra.mxu0 0.0
  %944 = vmatprep.subr.mxu0 0.0
  %945 = vmatpush2.xpose.msra.mxu0 0.0
  %946 = vmatprep.mubr.f32.mxu0 0.0
  %947 = vmatmul.mubr.f32.gmra.mxu0 %v878
  %v948 = vpop.f32.mrf.mxu0
  %v949 = vadd.f32 0.0, %v948
  %v950 = vpop.f32.mrf.mxu0
  %951 = vdwg.mxu0
  %952 = vrot.lane.b32.xlu0 %v212, 112
  %v953 = vpop.permute.xlu0 %952
  %954 = vrot.lane.b32.xlu0 %v212, 80
  %v955 = vpop.permute.xlu0 %954
  %v956 = vsel %vm218, %v953, 0
  %v958 = vsel %vm218, %v955, 0
  %960 = vmatprep.subr.mxu0 0.0
  %961 = vmatpush1.xpose.msra.mxu0 0.0
  %962 = vmatprep.subr.mxu0 0.0
  %963 = vmatpush1.xpose.msra.mxu0 0.0
  %964 = vmatprep.subr.mxu0 0.0
  %965 = vmatpush1.xpose.msra.mxu0 0.0
  %966 = vmatprep.subr.mxu0 0.0
  %967 = vmatpush1.xpose.msra.mxu0 0.0
  %968 = vmatprep.subr.mxu0 0.0
  %969 = vmatpush1.xpose.msra.mxu0 0.0
  %970 = vmatprep.subr.mxu0 0.0
  %971 = vmatpush1.xpose.msra.mxu0 0.0
  %972 = vmatprep.subr.mxu0 0.0
  %973 = vmatpush1.xpose.msra.mxu0 0.0
  %974 = vmatprep.subr.mxu0 0.0
  %975 = vmatpush1.xpose.msra.mxu0 0.0
  %976 = vmatprep.subr.mxu0 0.0
  %977 = vmatpush1.xpose.msra.mxu0 0.0
  %978 = vmatprep.subr.mxu0 0.0
  %979 = vmatpush1.xpose.msra.mxu0 0.0
  %980 = vmatprep.subr.mxu0 0.0
  %981 = vmatpush1.xpose.msra.mxu0 0.0
  %982 = vmatprep.subr.mxu0 0.0
  %983 = vmatpush1.xpose.msra.mxu0 0.0
  %984 = vmatprep.subr.mxu0 0.0
  %985 = vmatpush1.xpose.msra.mxu0 0.0
  %986 = vmatprep.subr.mxu0 0.0
  %987 = vmatpush1.xpose.msra.mxu0 0.0
  %988 = vmatprep.subr.mxu0 0.0
  %989 = vmatpush1.xpose.msra.mxu0 0.0
  %990 = vmatprep.subr.mxu0 0.0
  %991 = vmatpush1.xpose.msra.mxu0 %v958
  %992 = vmatprep.subr.mxu0 0.0
  %993 = vmatpush2.xpose.msra.mxu0 0.0
  %994 = vmatprep.subr.mxu0 0.0
  %995 = vmatpush2.xpose.msra.mxu0 0.0
  %996 = vmatprep.subr.mxu0 0.0
  %997 = vmatpush2.xpose.msra.mxu0 0.0
  %998 = vmatprep.subr.mxu0 0.0
  %999 = vmatpush2.xpose.msra.mxu0 0.0
  %1000 = vmatprep.subr.mxu0 0.0
  %1001 = vmatpush2.xpose.msra.mxu0 0.0
  %1002 = vmatprep.subr.mxu0 0.0
  %1003 = vmatpush2.xpose.msra.mxu0 0.0
  %1004 = vmatprep.subr.mxu0 0.0
  %1005 = vmatpush2.xpose.msra.mxu0 0.0
  %1006 = vmatprep.subr.mxu0 0.0
  %1007 = vmatpush2.xpose.msra.mxu0 0.0
  %1008 = vmatprep.subr.mxu0 0.0
  %1009 = vmatpush2.xpose.msra.mxu0 0.0
  %1010 = vmatprep.subr.mxu0 0.0
  %1011 = vmatpush2.xpose.msra.mxu0 0.0
  %1012 = vmatprep.subr.mxu0 0.0
  %1013 = vmatpush2.xpose.msra.mxu0 0.0
  %1014 = vmatprep.subr.mxu0 0.0
  %1015 = vmatpush2.xpose.msra.mxu0 0.0
  %1016 = vmatprep.subr.mxu0 0.0
  %1017 = vmatpush2.xpose.msra.mxu0 0.0
  %1018 = vmatprep.subr.mxu0 0.0
  %1019 = vmatpush2.xpose.msra.mxu0 0.0
  %1020 = vmatprep.subr.mxu0 0.0
  %1021 = vmatpush2.xpose.msra.mxu0 0.0
  %1022 = vmatprep.subr.mxu0 0.0
  %1023 = vmatpush2.xpose.msra.mxu0 0.0
  %1024 = vmatprep.mubr.f32.mxu0 0.0
  %1025 = vmatmul.mubr.f32.gmra.mxu0 %v956
  %v1026 = vpop.f32.mrf.mxu0
  %v1027 = vadd.f32 0.0, %v1026
  %v1028 = vpop.f32.mrf.mxu0
  %1029 = vdwg.mxu0
  %v1030 = vsel %vm218, %v949, -inf
  %1031 = vmax.xlane.f32.xlu0 %v1030
  %v1032 = vpop.xlane.xlu0 %1031
  %v1033 = vsel %vm218, %v1027, -inf
  %1034 = vmax.xlane.f32.xlu0 %v1033
  %v1035 = vpop.xlane.xlu0 %1034
  %v1036 = vsub.f32 %v949, %v1032
  %v1037 = vsub.f32 %v1027, %v1035
  %v1038 = vmul.f32 %v1036, 1.442695
  %v1039 = vpow.pop %v1038
  %v1040 = vmul.f32 %v1037, 1.442695
  %v1041 = vpow.pop %v1040
  %v1042 = vsel %vm218, %v1039, 0.0
  %1043 = vadd.xlane.f32.xlu0 %v1042
  %v1044 = vpop.xlane.xlu0 %1043
  %v1045 = vsel %vm218, %v1041, 0.0
  %1046 = vadd.xlane.f32.xlu0 %v1045
  %v1047 = vpop.xlane.xlu0 %1046
  %v1048 = vrcp.pop %v1044
  %v1049 = vrcp.pop %v1047
  %v1050 = vmul.f32 %v1039, %v1048
  %v1051 = vmul.f32 %v1041, %v1049
  %1052 = vrot.lane.b32.xlu0 %v209, 48
  %v1053 = vpop.permute.xlu0 %1052
  %v1056 = vsel %vm218, %v1050, 0
  %1058 = vmatprep.subr.mxu0 0.0
  %1059 = vmatpush1.msra.mxu0 0.0
  %1060 = vmatprep.subr.mxu0 0.0
  %1061 = vmatpush1.msra.mxu0 0.0
  %1062 = vmatprep.subr.mxu0 0.0
  %1063 = vmatpush1.msra.mxu0 0.0
  %1064 = vmatprep.subr.mxu0 0.0
  %1065 = vmatpush1.msra.mxu0 0.0
  %1066 = vmatprep.subr.mxu0 0.0
  %1067 = vmatpush1.msra.mxu0 0.0
  %1068 = vmatprep.subr.mxu0 0.0
  %1069 = vmatpush1.msra.mxu0 0.0
  %1070 = vmatprep.subr.mxu0 0.0
  %1071 = vmatpush1.msra.mxu0 0.0
  %1072 = vmatprep.subr.mxu0 0.0
  %1073 = vmatpush1.msra.mxu0 0.0
  %1074 = vmatprep.subr.mxu0 0.0
  %1075 = vmatpush1.msra.mxu0 0.0
  %1076 = vmatprep.subr.mxu0 0.0
  %1077 = vmatpush1.msra.mxu0 0.0
  %1078 = vmatprep.subr.mxu0 0.0
  %1079 = vmatpush1.msra.mxu0 0.0
  %1080 = vmatprep.subr.mxu0 0.0
  %1081 = vmatpush1.msra.mxu0 0.0
  %1082 = vmatprep.subr.mxu0 0.0
  %1083 = vmatpush1.msra.mxu0 0.0
  %1084 = vmatprep.subr.mxu0 0.0
  %1085 = vmatpush1.msra.mxu0 0.0
  %1086 = vmatprep.subr.mxu0 0.0
  %1087 = vmatpush1.msra.mxu0 0.0
  %1088 = vmatprep.subr.mxu0 0.0
  %1089 = vmatpush1.msra.mxu0 %v1053
  %1090 = vmatprep.subr.mxu0 0.0
  %1091 = vmatpush2.msra.mxu0 0.0
  %1092 = vmatprep.subr.mxu0 0.0
  %1093 = vmatpush2.msra.mxu0 0.0
  %1094 = vmatprep.subr.mxu0 0.0
  %1095 = vmatpush2.msra.mxu0 0.0
  %1096 = vmatprep.subr.mxu0 0.0
  %1097 = vmatpush2.msra.mxu0 0.0
  %1098 = vmatprep.subr.mxu0 0.0
  %1099 = vmatpush2.msra.mxu0 0.0
  %1100 = vmatprep.subr.mxu0 0.0
  %1101 = vmatpush2.msra.mxu0 0.0
  %1102 = vmatprep.subr.mxu0 0.0
  %1103 = vmatpush2.msra.mxu0 0.0
  %1104 = vmatprep.subr.mxu0 0.0
  %1105 = vmatpush2.msra.mxu0 0.0
  %1106 = vmatprep.subr.mxu0 0.0
  %1107 = vmatpush2.msra.mxu0 0.0
  %1108 = vmatprep.subr.mxu0 0.0
  %1109 = vmatpush2.msra.mxu0 0.0
  %1110 = vmatprep.subr.mxu0 0.0
  %1111 = vmatpush2.msra.mxu0 0.0
  %1112 = vmatprep.subr.mxu0 0.0
  %1113 = vmatpush2.msra.mxu0 0.0
  %1114 = vmatprep.subr.mxu0 0.0
  %1115 = vmatpush2.msra.mxu0 0.0
  %1116 = vmatprep.subr.mxu0 0.0
  %1117 = vmatpush2.msra.mxu0 0.0
  %1118 = vmatprep.subr.mxu0 0.0
  %1119 = vmatpush2.msra.mxu0 0.0
  %1120 = vmatprep.subr.mxu0 0.0
  %1121 = vmatpush2.msra.mxu0 0.0
  %1122 = vmatprep.mubr.f32.mxu0 0.0
  %1123 = vmatmul.mubr.f32.gmra.mxu0 %v1056
  %v1124 = vpop.f32.mrf.mxu0
  %v1125 = vadd.f32 0.0, %v1124
  %v1126 = vpop.f32.mrf.mxu0
  %1127 = vdwg.mxu0
  %1128 = vrot.lane.b32.xlu0 %v212, 48
  %v1129 = vpop.permute.xlu0 %1128
  %v1132 = vsel %vm218, %v1051, 0
  %1134 = vmatprep.subr.mxu0 0.0
  %1135 = vmatpush1.msra.mxu0 0.0
  %1136 = vmatprep.subr.mxu0 0.0
  %1137 = vmatpush1.msra.mxu0 0.0
  %1138 = vmatprep.subr.mxu0 0.0
  %1139 = vmatpush1.msra.mxu0 0.0
  %1140 = vmatprep.subr.mxu0 0.0
  %1141 = vmatpush1.msra.mxu0 0.0
  %1142 = vmatprep.subr.mxu0 0.0
  %1143 = vmatpush1.msra.mxu0 0.0
  %1144 = vmatprep.subr.mxu0 0.0
  %1145 = vmatpush1.msra.mxu0 0.0
  %1146 = vmatprep.subr.mxu0 0.0
  %1147 = vmatpush1.msra.mxu0 0.0
  %1148 = vmatprep.subr.mxu0 0.0
  %1149 = vmatpush1.msra.mxu0 0.0
  %1150 = vmatprep.subr.mxu0 0.0
  %1151 = vmatpush1.msra.mxu0 0.0
  %1152 = vmatprep.subr.mxu0 0.0
  %1153 = vmatpush1.msra.mxu0 0.0
  %1154 = vmatprep.subr.mxu0 0.0
  %1155 = vmatpush1.msra.mxu0 0.0
  %1156 = vmatprep.subr.mxu0 0.0
  %1157 = vmatpush1.msra.mxu0 0.0
  %1158 = vmatprep.subr.mxu0 0.0
  %1159 = vmatpush1.msra.mxu0 0.0
  %1160 = vmatprep.subr.mxu0 0.0
  %1161 = vmatpush1.msra.mxu0 0.0
  %1162 = vmatprep.subr.mxu0 0.0
  %1163 = vmatpush1.msra.mxu0 0.0
  %1164 = vmatprep.subr.mxu0 0.0
  %1165 = vmatpush1.msra.mxu0 %v1129
  %1166 = vmatprep.subr.mxu0 0.0
  %1167 = vmatpush2.msra.mxu0 0.0
  %1168 = vmatprep.subr.mxu0 0.0
  %1169 = vmatpush2.msra.mxu0 0.0
  %1170 = vmatprep.subr.mxu0 0.0
  %1171 = vmatpush2.msra.mxu0 0.0
  %1172 = vmatprep.subr.mxu0 0.0
  %1173 = vmatpush2.msra.mxu0 0.0
  %1174 = vmatprep.subr.mxu0 0.0
  %1175 = vmatpush2.msra.mxu0 0.0
  %1176 = vmatprep.subr.mxu0 0.0
  %1177 = vmatpush2.msra.mxu0 0.0
  %1178 = vmatprep.subr.mxu0 0.0
  %1179 = vmatpush2.msra.mxu0 0.0
  %1180 = vmatprep.subr.mxu0 0.0
  %1181 = vmatpush2.msra.mxu0 0.0
  %1182 = vmatprep.subr.mxu0 0.0
  %1183 = vmatpush2.msra.mxu0 0.0
  %1184 = vmatprep.subr.mxu0 0.0
  %1185 = vmatpush2.msra.mxu0 0.0
  %1186 = vmatprep.subr.mxu0 0.0
  %1187 = vmatpush2.msra.mxu0 0.0
  %1188 = vmatprep.subr.mxu0 0.0
  %1189 = vmatpush2.msra.mxu0 0.0
  %1190 = vmatprep.subr.mxu0 0.0
  %1191 = vmatpush2.msra.mxu0 0.0
  %1192 = vmatprep.subr.mxu0 0.0
  %1193 = vmatpush2.msra.mxu0 0.0
  %1194 = vmatprep.subr.mxu0 0.0
  %1195 = vmatpush2.msra.mxu0 0.0
  %1196 = vmatprep.subr.mxu0 0.0
  %1197 = vmatpush2.msra.mxu0 0.0
  %1198 = vmatprep.mubr.f32.mxu0 0.0
  %1199 = vmatmul.mubr.f32.gmra.mxu0 %v1132
  %v1200 = vpop.f32.mrf.mxu0
  %v1201 = vadd.f32 0.0, %v1200
  %v1202 = vpop.f32.mrf.mxu0
  %1203 = vdwg.mxu0
  %1204 = vrot.lane.b32.xlu0 %v209, 104
  %v1205 = vpop.permute.xlu0 %1204
  %1206 = vrot.lane.b32.xlu0 %v209, 72
  %v1207 = vpop.permute.xlu0 %1206
  %v1208 = vsel %vm218, %v1205, 0
  %v1210 = vsel %vm218, %v1207, 0
  %1212 = vmatprep.subr.mxu0 0.0
  %1213 = vmatpush1.xpose.msra.mxu0 0.0
  %1214 = vmatprep.subr.mxu0 0.0
  %1215 = vmatpush1.xpose.msra.mxu0 0.0
  %1216 = vmatprep.subr.mxu0 0.0
  %1217 = vmatpush1.xpose.msra.mxu0 0.0
  %1218 = vmatprep.subr.mxu0 0.0
  %1219 = vmatpush1.xpose.msra.mxu0 0.0
  %1220 = vmatprep.subr.mxu0 0.0
  %1221 = vmatpush1.xpose.msra.mxu0 0.0
  %1222 = vmatprep.subr.mxu0 0.0
  %1223 = vmatpush1.xpose.msra.mxu0 0.0
  %1224 = vmatprep.subr.mxu0 0.0
  %1225 = vmatpush1.xpose.msra.mxu0 0.0
  %1226 = vmatprep.subr.mxu0 0.0
  %1227 = vmatpush1.xpose.msra.mxu0 0.0
  %1228 = vmatprep.subr.mxu0 0.0
  %1229 = vmatpush1.xpose.msra.mxu0 0.0
  %1230 = vmatprep.subr.mxu0 0.0
  %1231 = vmatpush1.xpose.msra.mxu0 0.0
  %1232 = vmatprep.subr.mxu0 0.0
  %1233 = vmatpush1.xpose.msra.mxu0 0.0
  %1234 = vmatprep.subr.mxu0 0.0
  %1235 = vmatpush1.xpose.msra.mxu0 0.0
  %1236 = vmatprep.subr.mxu0 0.0
  %1237 = vmatpush1.xpose.msra.mxu0 0.0
  %1238 = vmatprep.subr.mxu0 0.0
  %1239 = vmatpush1.xpose.msra.mxu0 0.0
  %1240 = vmatprep.subr.mxu0 0.0
  %1241 = vmatpush1.xpose.msra.mxu0 0.0
  %1242 = vmatprep.subr.mxu0 0.0
  %1243 = vmatpush1.xpose.msra.mxu0 %v1210
  %1244 = vmatprep.subr.mxu0 0.0
  %1245 = vmatpush2.xpose.msra.mxu0 0.0
  %1246 = vmatprep.subr.mxu0 0.0
  %1247 = vmatpush2.xpose.msra.mxu0 0.0
  %1248 = vmatprep.subr.mxu0 0.0
  %1249 = vmatpush2.xpose.msra.mxu0 0.0
  %1250 = vmatprep.subr.mxu0 0.0
  %1251 = vmatpush2.xpose.msra.mxu0 0.0
  %1252 = vmatprep.subr.mxu0 0.0
  %1253 = vmatpush2.xpose.msra.mxu0 0.0
  %1254 = vmatprep.subr.mxu0 0.0
  %1255 = vmatpush2.xpose.msra.mxu0 0.0
  %1256 = vmatprep.subr.mxu0 0.0
  %1257 = vmatpush2.xpose.msra.mxu0 0.0
  %1258 = vmatprep.subr.mxu0 0.0
  %1259 = vmatpush2.xpose.msra.mxu0 0.0
  %1260 = vmatprep.subr.mxu0 0.0
  %1261 = vmatpush2.xpose.msra.mxu0 0.0
  %1262 = vmatprep.subr.mxu0 0.0
  %1263 = vmatpush2.xpose.msra.mxu0 0.0
  %1264 = vmatprep.subr.mxu0 0.0
  %1265 = vmatpush2.xpose.msra.mxu0 0.0
  %1266 = vmatprep.subr.mxu0 0.0
  %1267 = vmatpush2.xpose.msra.mxu0 0.0
  %1268 = vmatprep.subr.mxu0 0.0
  %1269 = vmatpush2.xpose.msra.mxu0 0.0
  %1270 = vmatprep.subr.mxu0 0.0
  %1271 = vmatpush2.xpose.msra.mxu0 0.0
  %1272 = vmatprep.subr.mxu0 0.0
  %1273 = vmatpush2.xpose.msra.mxu0 0.0
  %1274 = vmatprep.subr.mxu0 0.0
  %1275 = vmatpush2.xpose.msra.mxu0 0.0
  %1276 = vmatprep.mubr.f32.mxu0 0.0
  %1277 = vmatmul.mubr.f32.gmra.mxu0 %v1208
  %v1278 = vpop.f32.mrf.mxu0
  %v1279 = vadd.f32 0.0, %v1278
  %v1280 = vpop.f32.mrf.mxu0
  %1281 = vdwg.mxu0
  %1282 = vrot.lane.b32.xlu0 %v212, 104
  %v1283 = vpop.permute.xlu0 %1282
  %1284 = vrot.lane.b32.xlu0 %v212, 72
  %v1285 = vpop.permute.xlu0 %1284
  %v1286 = vsel %vm218, %v1283, 0
  %v1288 = vsel %vm218, %v1285, 0
  %1290 = vmatprep.subr.mxu0 0.0
  %1291 = vmatpush1.xpose.msra.mxu0 0.0
  %1292 = vmatprep.subr.mxu0 0.0
  %1293 = vmatpush1.xpose.msra.mxu0 0.0
  %1294 = vmatprep.subr.mxu0 0.0
  %1295 = vmatpush1.xpose.msra.mxu0 0.0
  %1296 = vmatprep.subr.mxu0 0.0
  %1297 = vmatpush1.xpose.msra.mxu0 0.0
  %1298 = vmatprep.subr.mxu0 0.0
  %1299 = vmatpush1.xpose.msra.mxu0 0.0
  %1300 = vmatprep.subr.mxu0 0.0
  %1301 = vmatpush1.xpose.msra.mxu0 0.0
  %1302 = vmatprep.subr.mxu0 0.0
  %1303 = vmatpush1.xpose.msra.mxu0 0.0
  %1304 = vmatprep.subr.mxu0 0.0
  %1305 = vmatpush1.xpose.msra.mxu0 0.0
  %1306 = vmatprep.subr.mxu0 0.0
  %1307 = vmatpush1.xpose.msra.mxu0 0.0
  %1308 = vmatprep.subr.mxu0 0.0
  %1309 = vmatpush1.xpose.msra.mxu0 0.0
  %1310 = vmatprep.subr.mxu0 0.0
  %1311 = vmatpush1.xpose.msra.mxu0 0.0
  %1312 = vmatprep.subr.mxu0 0.0
  %1313 = vmatpush1.xpose.msra.mxu0 0.0
  %1314 = vmatprep.subr.mxu0 0.0
  %1315 = vmatpush1.xpose.msra.mxu0 0.0
  %1316 = vmatprep.subr.mxu0 0.0
  %1317 = vmatpush1.xpose.msra.mxu0 0.0
  %1318 = vmatprep.subr.mxu0 0.0
  %1319 = vmatpush1.xpose.msra.mxu0 0.0
  %1320 = vmatprep.subr.mxu0 0.0
  %1321 = vmatpush1.xpose.msra.mxu0 %v1288
  %1322 = vmatprep.subr.mxu0 0.0
  %1323 = vmatpush2.xpose.msra.mxu0 0.0
  %1324 = vmatprep.subr.mxu0 0.0
  %1325 = vmatpush2.xpose.msra.mxu0 0.0
  %1326 = vmatprep.subr.mxu0 0.0
  %1327 = vmatpush2.xpose.msra.mxu0 0.0
  %1328 = vmatprep.subr.mxu0 0.0
  %1329 = vmatpush2.xpose.msra.mxu0 0.0
  %1330 = vmatprep.subr.mxu0 0.0
  %1331 = vmatpush2.xpose.msra.mxu0 0.0
  %1332 = vmatprep.subr.mxu0 0.0
  %1333 = vmatpush2.xpose.msra.mxu0 0.0
  %1334 = vmatprep.subr.mxu0 0.0
  %1335 = vmatpush2.xpose.msra.mxu0 0.0
  %1336 = vmatprep.subr.mxu0 0.0
  %1337 = vmatpush2.xpose.msra.mxu0 0.0
  %1338 = vmatprep.subr.mxu0 0.0
  %1339 = vmatpush2.xpose.msra.mxu0 0.0
  %1340 = vmatprep.subr.mxu0 0.0
  %1341 = vmatpush2.xpose.msra.mxu0 0.0
  %1342 = vmatprep.subr.mxu0 0.0
  %1343 = vmatpush2.xpose.msra.mxu0 0.0
  %1344 = vmatprep.subr.mxu0 0.0
  %1345 = vmatpush2.xpose.msra.mxu0 0.0
  %1346 = vmatprep.subr.mxu0 0.0
  %1347 = vmatpush2.xpose.msra.mxu0 0.0
  %1348 = vmatprep.subr.mxu0 0.0
  %1349 = vmatpush2.xpose.msra.mxu0 0.0
  %1350 = vmatprep.subr.mxu0 0.0
  %1351 = vmatpush2.xpose.msra.mxu0 0.0
  %1352 = vmatprep.subr.mxu0 0.0
  %1353 = vmatpush2.xpose.msra.mxu0 0.0
  %1354 = vmatprep.mubr.f32.mxu0 0.0
  %1355 = vmatmul.mubr.f32.gmra.mxu0 %v1286
  %v1356 = vpop.f32.mrf.mxu0
  %v1357 = vadd.f32 0.0, %v1356
  %v1358 = vpop.f32.mrf.mxu0
  %1359 = vdwg.mxu0
  %v1360 = vsel %vm218, %v1279, -inf
  %1361 = vmax.xlane.f32.xlu0 %v1360
  %v1362 = vpop.xlane.xlu0 %1361
  %v1363 = vsel %vm218, %v1357, -inf
  %1364 = vmax.xlane.f32.xlu0 %v1363
  %v1365 = vpop.xlane.xlu0 %1364
  %v1366 = vsub.f32 %v1279, %v1362
  %v1367 = vsub.f32 %v1357, %v1365
  %v1368 = vmul.f32 %v1366, 1.442695
  %v1369 = vpow.pop %v1368
  %v1370 = vmul.f32 %v1367, 1.442695
  %v1371 = vpow.pop %v1370
  %v1372 = vsel %vm218, %v1369, 0.0
  %1373 = vadd.xlane.f32.xlu0 %v1372
  %v1374 = vpop.xlane.xlu0 %1373
  %v1375 = vsel %vm218, %v1371, 0.0
  %1376 = vadd.xlane.f32.xlu0 %v1375
  %v1377 = vpop.xlane.xlu0 %1376
  %v1378 = vrcp.pop %v1374
  %v1379 = vrcp.pop %v1377
  %v1380 = vmul.f32 %v1369, %v1378
  %v1381 = vmul.f32 %v1371, %v1379
  %1382 = vrot.lane.b32.xlu0 %v209, 40
  %v1383 = vpop.permute.xlu0 %1382
  %v1386 = vsel %vm218, %v1380, 0
  %1388 = vmatprep.subr.mxu0 0.0
  %1389 = vmatpush1.msra.mxu0 0.0
  %1390 = vmatprep.subr.mxu0 0.0
  %1391 = vmatpush1.msra.mxu0 0.0
  %1392 = vmatprep.subr.mxu0 0.0
  %1393 = vmatpush1.msra.mxu0 0.0
  %1394 = vmatprep.subr.mxu0 0.0
  %1395 = vmatpush1.msra.mxu0 0.0
  %1396 = vmatprep.subr.mxu0 0.0
  %1397 = vmatpush1.msra.mxu0 0.0
  %1398 = vmatprep.subr.mxu0 0.0
  %1399 = vmatpush1.msra.mxu0 0.0
  %1400 = vmatprep.subr.mxu0 0.0
  %1401 = vmatpush1.msra.mxu0 0.0
  %1402 = vmatprep.subr.mxu0 0.0
  %1403 = vmatpush1.msra.mxu0 0.0
  %1404 = vmatprep.subr.mxu0 0.0
  %1405 = vmatpush1.msra.mxu0 0.0
  %1406 = vmatprep.subr.mxu0 0.0
  %1407 = vmatpush1.msra.mxu0 0.0
  %1408 = vmatprep.subr.mxu0 0.0
  %1409 = vmatpush1.msra.mxu0 0.0
  %1410 = vmatprep.subr.mxu0 0.0
  %1411 = vmatpush1.msra.mxu0 0.0
  %1412 = vmatprep.subr.mxu0 0.0
  %1413 = vmatpush1.msra.mxu0 0.0
  %1414 = vmatprep.subr.mxu0 0.0
  %1415 = vmatpush1.msra.mxu0 0.0
  %1416 = vmatprep.subr.mxu0 0.0
  %1417 = vmatpush1.msra.mxu0 0.0
  %1418 = vmatprep.subr.mxu0 0.0
  %1419 = vmatpush1.msra.mxu0 %v1383
  %1420 = vmatprep.subr.mxu0 0.0
  %1421 = vmatpush2.msra.mxu0 0.0
  %1422 = vmatprep.subr.mxu0 0.0
  %1423 = vmatpush2.msra.mxu0 0.0
  %1424 = vmatprep.subr.mxu0 0.0
  %1425 = vmatpush2.msra.mxu0 0.0
  %1426 = vmatprep.subr.mxu0 0.0
  %1427 = vmatpush2.msra.mxu0 0.0
  %1428 = vmatprep.subr.mxu0 0.0
  %1429 = vmatpush2.msra.mxu0 0.0
  %1430 = vmatprep.subr.mxu0 0.0
  %1431 = vmatpush2.msra.mxu0 0.0
  %1432 = vmatprep.subr.mxu0 0.0
  %1433 = vmatpush2.msra.mxu0 0.0
  %1434 = vmatprep.subr.mxu0 0.0
  %1435 = vmatpush2.msra.mxu0 0.0
  %1436 = vmatprep.subr.mxu0 0.0
  %1437 = vmatpush2.msra.mxu0 0.0
  %1438 = vmatprep.subr.mxu0 0.0
  %1439 = vmatpush2.msra.mxu0 0.0
  %1440 = vmatprep.subr.mxu0 0.0
  %1441 = vmatpush2.msra.mxu0 0.0
  %1442 = vmatprep.subr.mxu0 0.0
  %1443 = vmatpush2.msra.mxu0 0.0
  %1444 = vmatprep.subr.mxu0 0.0
  %1445 = vmatpush2.msra.mxu0 0.0
  %1446 = vmatprep.subr.mxu0 0.0
  %1447 = vmatpush2.msra.mxu0 0.0
  %1448 = vmatprep.subr.mxu0 0.0
  %1449 = vmatpush2.msra.mxu0 0.0
  %1450 = vmatprep.subr.mxu0 0.0
  %1451 = vmatpush2.msra.mxu0 0.0
  %1452 = vmatprep.mubr.f32.mxu0 0.0
  %1453 = vmatmul.mubr.f32.gmra.mxu0 %v1386
  %v1454 = vpop.f32.mrf.mxu0
  %v1455 = vadd.f32 0.0, %v1454
  %v1456 = vpop.f32.mrf.mxu0
  %1457 = vdwg.mxu0
  %1458 = vrot.lane.b32.xlu0 %v212, 40
  %v1459 = vpop.permute.xlu0 %1458
  %v1462 = vsel %vm218, %v1381, 0
  %1464 = vmatprep.subr.mxu0 0.0
  %1465 = vmatpush1.msra.mxu0 0.0
  %1466 = vmatprep.subr.mxu0 0.0
  %1467 = vmatpush1.msra.mxu0 0.0
  %1468 = vmatprep.subr.mxu0 0.0
  %1469 = vmatpush1.msra.mxu0 0.0
  %1470 = vmatprep.subr.mxu0 0.0
  %1471 = vmatpush1.msra.mxu0 0.0
  %1472 = vmatprep.subr.mxu0 0.0
  %1473 = vmatpush1.msra.mxu0 0.0
  %1474 = vmatprep.subr.mxu0 0.0
  %1475 = vmatpush1.msra.mxu0 0.0
  %1476 = vmatprep.subr.mxu0 0.0
  %1477 = vmatpush1.msra.mxu0 0.0
  %1478 = vmatprep.subr.mxu0 0.0
  %1479 = vmatpush1.msra.mxu0 0.0
  %1480 = vmatprep.subr.mxu0 0.0
  %1481 = vmatpush1.msra.mxu0 0.0
  %1482 = vmatprep.subr.mxu0 0.0
  %1483 = vmatpush1.msra.mxu0 0.0
  %1484 = vmatprep.subr.mxu0 0.0
  %1485 = vmatpush1.msra.mxu0 0.0
  %1486 = vmatprep.subr.mxu0 0.0
  %1487 = vmatpush1.msra.mxu0 0.0
  %1488 = vmatprep.subr.mxu0 0.0
  %1489 = vmatpush1.msra.mxu0 0.0
  %1490 = vmatprep.subr.mxu0 0.0
  %1491 = vmatpush1.msra.mxu0 0.0
  %1492 = vmatprep.subr.mxu0 0.0
  %1493 = vmatpush1.msra.mxu0 0.0
  %1494 = vmatprep.subr.mxu0 0.0
  %1495 = vmatpush1.msra.mxu0 %v1459
  %1496 = vmatprep.subr.mxu0 0.0
  %1497 = vmatpush2.msra.mxu0 0.0
  %1498 = vmatprep.subr.mxu0 0.0
  %1499 = vmatpush2.msra.mxu0 0.0
  %1500 = vmatprep.subr.mxu0 0.0
  %1501 = vmatpush2.msra.mxu0 0.0
  %1502 = vmatprep.subr.mxu0 0.0
  %1503 = vmatpush2.msra.mxu0 0.0
  %1504 = vmatprep.subr.mxu0 0.0
  %1505 = vmatpush2.msra.mxu0 0.0
  %1506 = vmatprep.subr.mxu0 0.0
  %1507 = vmatpush2.msra.mxu0 0.0
  %1508 = vmatprep.subr.mxu0 0.0
  %1509 = vmatpush2.msra.mxu0 0.0
  %1510 = vmatprep.subr.mxu0 0.0
  %1511 = vmatpush2.msra.mxu0 0.0
  %1512 = vmatprep.subr.mxu0 0.0
  %1513 = vmatpush2.msra.mxu0 0.0
  %1514 = vmatprep.subr.mxu0 0.0
  %1515 = vmatpush2.msra.mxu0 0.0
  %1516 = vmatprep.subr.mxu0 0.0
  %1517 = vmatpush2.msra.mxu0 0.0
  %1518 = vmatprep.subr.mxu0 0.0
  %1519 = vmatpush2.msra.mxu0 0.0
  %1520 = vmatprep.subr.mxu0 0.0
  %1521 = vmatpush2.msra.mxu0 0.0
  %1522 = vmatprep.subr.mxu0 0.0
  %1523 = vmatpush2.msra.mxu0 0.0
  %1524 = vmatprep.subr.mxu0 0.0
  %1525 = vmatpush2.msra.mxu0 0.0
  %1526 = vmatprep.subr.mxu0 0.0
  %1527 = vmatpush2.msra.mxu0 0.0
  %1528 = vmatprep.mubr.f32.mxu0 0.0
  %1529 = vmatmul.mubr.f32.gmra.mxu0 %v1462
  %v1530 = vpop.f32.mrf.mxu0
  %v1531 = vadd.f32 0.0, %v1530
  %v1532 = vpop.f32.mrf.mxu0
  %1533 = vdwg.mxu0
  %1536 = vrot.lane.b32.xlu0 %v795, 8
  %v1537 = vpop.permute.xlu0 %1536
  %1538 = vrot.lane.b32.xlu0 %v871, 8
  %v1539 = vpop.permute.xlu0 %1538
  %1544 = vrot.lane.b32.xlu0 %v1125, 16
  %v1545 = vpop.permute.xlu0 %1544
  %1546 = vrot.lane.b32.xlu0 %v1201, 16
  %v1547 = vpop.permute.xlu0 %1546
  %1552 = vrot.lane.b32.xlu0 %v1455, 24
  %v1553 = vpop.permute.xlu0 %1552
  %1554 = vrot.lane.b32.xlu0 %v1531, 24
  %v1555 = vpop.permute.xlu0 %1554
  %v1558 = vsel %vm218, %v465, %v1537
  %v1559 = vsel %vm218, %v541, %v1539
  %vm1560 = vcmask 130048
  %v1561 = vsel %vm1560, %v1558, %v1545
  %v1562 = vsel %vm1560, %v1559, %v1547
  %vm1563 = vcmask 195584
  %v1564 = vsel %vm1563, %v1561, %v1553
  %v1565 = vsel %vm1563, %v1562, %v1555
  %v1566 = vpack.c.bf16 %v1565, %v1564
  %v1567 = vld [vmem:[%s2] sm:$0xf]
  %v1568 = vld [vmem:[%s2 + $0x4] sm:$0xf]
  %v1569 = vld [vmem:[%s2 + $0x8] sm:$0xf]
  %v1570 = vld [vmem:[%s2 + $0xc] sm:$0xf]
  %v1575 = vunpack.c.l.b16 %v1567
  %v1576 = vunpack.c.l.b16 %v1568
  %v1577 = vunpack.c.l.b16 %v1569
  %v1578 = vunpack.c.l.b16 %v1570
  %v1579 = vpack.c.b16 %v1576, %v1575
  %v1580 = vpack.c.b16 %v1578, %v1577
  %1581 = vrot.lane.b32.xlu0 %v1579, 32
  %v1582 = vpop.permute.xlu0 %1581
  %1583 = vrot.lane.b32.xlu0 %v1580, 32
  %v1584 = vpop.permute.xlu0 %1583
  %v1588 = vsel %vm170, %v1566, 0
  %1590 = vmatprep.subr.bf16.mxu0 0
  %1591 = vmatpush1.bf16.msra.mxu0 0
  %1592 = vmatprep.subr.bf16.mxu0 0
  %1593 = vmatpush1.bf16.msra.mxu0 0
  %1594 = vmatprep.subr.bf16.mxu0 0
  %1595 = vmatpush1.bf16.msra.mxu0 0
  %1596 = vmatprep.subr.bf16.mxu0 0
  %1597 = vmatpush1.bf16.msra.mxu0 0
  %1598 = vmatprep.subr.bf16.mxu0 0
  %1599 = vmatpush1.bf16.msra.mxu0 0
  %1600 = vmatprep.subr.bf16.mxu0 0
  %1601 = vmatpush1.bf16.msra.mxu0 0
  %1602 = vmatprep.subr.bf16.mxu0 0
  %1603 = vmatpush1.bf16.msra.mxu0 %v1584
  %1604 = vmatprep.subr.bf16.mxu0 0
  %1605 = vmatpush1.bf16.msra.mxu0 %v1582
  %1606 = vmatprep.subr.bf16.mxu0 0
  %1607 = vmatpush2.bf16.msra.mxu0 0
  %1608 = vmatprep.subr.bf16.mxu0 0
  %1609 = vmatpush2.bf16.msra.mxu0 0
  %1610 = vmatprep.subr.bf16.mxu0 0
  %1611 = vmatpush2.bf16.msra.mxu0 0
  %1612 = vmatprep.subr.bf16.mxu0 0
  %1613 = vmatpush2.bf16.msra.mxu0 0
  %1614 = vmatprep.subr.bf16.mxu0 0
  %1615 = vmatpush2.bf16.msra.mxu0 0
  %1616 = vmatprep.subr.bf16.mxu0 0
  %1617 = vmatpush2.bf16.msra.mxu0 0
  %1618 = vmatprep.subr.bf16.mxu0 0
  %1619 = vmatpush2.bf16.msra.mxu0 0
  %1620 = vmatprep.subr.bf16.mxu0 0
  %1621 = vmatpush2.bf16.msra.mxu0 0
  %1622 = vmatprep.mubr.bf16.mxu0 0
  %1623 = vmatmul.mubr.bf16.gmra.mxu0 %v1588
  %v1624 = vpop.f32.mrf.mxu0
  %v1625 = vadd.f32 0.0, %v1624
  %v1626 = vpop.f32.mrf.mxu0
  %v1627 = vpop.f32.mrf.mxu0
  %v1628 = vadd.f32 0.0, %v1627
  %v1629 = vpop.f32.mrf.mxu0
  %1630 = vdwg.mxu0
  %v1631 = vadd.f32 %v151, %v1625
  %v1632 = vadd.f32 %v152, %v1628
  %v1633 = vld [vmem:[%s4] sm:$0x1]
  %v1634 = vld [vmem:[%s4 + $0x1] sm:$0x1]
  %v1635 = vsel %vm170, %v1631, 0.0
  %1636 = vadd.xlane.f32.xlu0 %v1635
  %v1637 = vpop.xlane.xlu0 %1636
  %v1638 = vsel %vm170, %v1632, 0.0
  %1639 = vadd.xlane.f32.xlu0 %v1638
  %v1640 = vpop.xlane.xlu0 %1639
  %v1641 = vrcp.pop 32.0
  %v1642 = vmul.f32 %v1637, %v1641
  %v1643 = vmul.f32 %v1640, %v1641
  %v1644 = vsub.f32 %v1631, %v1642
  %v1645 = vsub.f32 %v1632, %v1643
  %v1646 = vmul.f32 %v1644, %v1644
  %v1647 = vmul.f32 %v1645, %v1645
  %v1648 = vsel %vm170, %v1646, 0.0
  %1649 = vadd.xlane.f32.xlu0 %v1648
  %v1650 = vpop.xlane.xlu0 %1649
  %v1651 = vsel %vm170, %v1647, 0.0
  %1652 = vadd.xlane.f32.xlu0 %v1651
  %v1653 = vpop.xlane.xlu0 %1652
  %v1654 = vmul.f32 %v1650, %v1641
  %v1655 = vmul.f32 %v1653, %v1641
  %v1656 = vadd.f32 %v1654, 1e-06
  %v1657 = vadd.f32 %v1655, 1e-06
  %v1658 = vrsqrt.pop %v1656
  %v1659 = vrsqrt.pop %v1657
  %v1660 = vmul.f32 %v1644, %v1658
  %v1661 = vmul.f32 %v1645, %v1659
  %v1662 = vlaneseq
  %v1663 = vshrl.u32 %v1662, 7
  %v1664 = vsub.s32 0, %v1663
  %v1665 = vrot.slane %v1633, %v1664
  %v1666 = vmul.f32 %v1660, %v1665
  %v1667 = vmul.f32 %v1661, %v1665
  %v1668 = vlaneseq
  %v1669 = vshrl.u32 %v1668, 7
  %v1670 = vsub.s32 0, %v1669
  %v1671 = vrot.slane %v1634, %v1670
  %v1672 = vadd.f32 %v1666, %v1671
  %v1673 = vadd.f32 %v1667, %v1671
  %v1674 = vpack.c.bf16 %v1673, %v1672
  %v1675 = vld [vmem:[%s3] sm:$0xf]
  %v1676 = vld [vmem:[%s3 + $0x4] sm:$0xf]
  %v1677 = vld [vmem:[%s3 + $0x8] sm:$0xf]
  %v1678 = vld [vmem:[%s3 + $0xc] sm:$0xf]
  %v1679 = vld [vmem:[%s4 + $0x2] sm:$0x1]
  %v1680 = vlaneseq
  %v1681 = vshrl.u32 %v1680, 7
  %v1682 = vsub.s32 0, %v1681
  %v1683 = vrot.slane %v1679, %v1682
  %v1688 = vunpack.c.l.b16 %v1675
  %v1689 = vunpack.c.l.b16 %v1676
  %v1690 = vunpack.c.l.b16 %v1677
  %v1691 = vunpack.c.l.b16 %v1678
  %v1692 = vpack.c.b16 %v1689, %v1688
  %v1693 = vpack.c.b16 %v1691, %v1690
  %v1697 = vsel %vm170, %v1674, 0
  %1699 = vmatprep.subr.bf16.mxu0 0
  %1700 = vmatpush1.bf16.msra.mxu0 0
  %1701 = vmatprep.subr.bf16.mxu0 0
  %1702 = vmatpush1.bf16.msra.mxu0 0
  %1703 = vmatprep.subr.bf16.mxu0 0
  %1704 = vmatpush1.bf16.msra.mxu0 0
  %1705 = vmatprep.subr.bf16.mxu0 0
  %1706 = vmatpush1.bf16.msra.mxu0 0
  %1707 = vmatprep.subr.bf16.mxu0 0
  %1708 = vmatpush1.bf16.msra.mxu0 0
  %1709 = vmatprep.subr.bf16.mxu0 0
  %1710 = vmatpush1.bf16.msra.mxu0 0
  %1711 = vmatprep.subr.bf16.mxu0 0
  %1712 = vmatpush1.bf16.msra.mxu0 %v1693
  %1713 = vmatprep.subr.bf16.mxu0 0
  %1714 = vmatpush1.bf16.msra.mxu0 %v1692
  %1715 = vmatprep.subr.bf16.mxu0 0
  %1716 = vmatpush2.bf16.msra.mxu0 0
  %1717 = vmatprep.subr.bf16.mxu0 0
  %1718 = vmatpush2.bf16.msra.mxu0 0
  %1719 = vmatprep.subr.bf16.mxu0 0
  %1720 = vmatpush2.bf16.msra.mxu0 0
  %1721 = vmatprep.subr.bf16.mxu0 0
  %1722 = vmatpush2.bf16.msra.mxu0 0
  %1723 = vmatprep.subr.bf16.mxu0 0
  %1724 = vmatpush2.bf16.msra.mxu0 0
  %1725 = vmatprep.subr.bf16.mxu0 0
  %1726 = vmatpush2.bf16.msra.mxu0 0
  %1727 = vmatprep.subr.bf16.mxu0 0
  %1728 = vmatpush2.bf16.msra.mxu0 0
  %1729 = vmatprep.subr.bf16.mxu0 0
  %1730 = vmatpush2.bf16.msra.mxu0 0
  %1731 = vmatprep.mubr.bf16.mxu0 0
  %1732 = vmatmul.mubr.bf16.gmra.mxu0 %v1697
  %v1733 = vpop.f32.mrf.mxu0
  %v1734 = vadd.f32 %v1683, %v1733
  %v1735 = vpop.f32.mrf.mxu0
  %v1736 = vpop.f32.mrf.mxu0
  %v1737 = vadd.f32 %v1683, %v1736
  %v1738 = vpop.f32.mrf.mxu0
  %1739 = vdwg.mxu0
  %v1740 = vmax.f32 %v1734, 0.0
  %v1741 = vmax.f32 %v1737, 0.0
  %v1742 = vpack.c.bf16 %v1741, %v1740
  %v1743 = vld [vmem:[%s4 + $0x3] sm:$0x1]
  %v1744 = vlaneseq
  %v1745 = vshrl.u32 %v1744, 7
  %v1746 = vsub.s32 0, %v1745
  %v1747 = vrot.slane %v1743, %v1746
  %1748 = vrot.lane.b32.xlu0 %v1692, 64
  %v1749 = vpop.permute.xlu0 %1748
  %1750 = vrot.lane.b32.xlu0 %v1693, 64
  %v1751 = vpop.permute.xlu0 %1750
  %vm1752 = vcmask 523264
  %v1754 = vsel %vm1752, %v1742, 0
  %v1757 = vsel %vm1752, %v1749, 0
  %v1760 = vsel %vm1752, %v1751, 0
  %1762 = vmatprep.subr.bf16.mxu0 0
  %1763 = vmatpush1.bf16.xpose.msra.mxu0 0
  %1764 = vmatprep.subr.bf16.mxu0 0
  %1765 = vmatpush1.bf16.xpose.msra.mxu0 0
  %1766 = vmatprep.subr.bf16.mxu0 0
  %1767 = vmatpush1.bf16.xpose.msra.mxu0 0
  %1768 = vmatprep.subr.bf16.mxu0 0
  %1769 = vmatpush1.bf16.xpose.msra.mxu0 0
  %1770 = vmatprep.subr.bf16.mxu0 0
  %1771 = vmatpush1.bf16.xpose.msra.mxu0 0
  %1772 = vmatprep.subr.bf16.mxu0 0
  %1773 = vmatpush1.bf16.xpose.msra.mxu0 0
  %1774 = vmatprep.subr.bf16.mxu0 0
  %1775 = vmatpush1.bf16.xpose.msra.mxu0 %v1760
  %1776 = vmatprep.subr.bf16.mxu0 0
  %1777 = vmatpush1.bf16.xpose.msra.mxu0 %v1757
  %1778 = vmatprep.subr.bf16.mxu0 0
  %1779 = vmatpush2.bf16.xpose.msra.mxu0 0
  %1780 = vmatprep.subr.bf16.mxu0 0
  %1781 = vmatpush2.bf16.xpose.msra.mxu0 0
  %1782 = vmatprep.subr.bf16.mxu0 0
  %1783 = vmatpush2.bf16.xpose.msra.mxu0 0
  %1784 = vmatprep.subr.bf16.mxu0 0
  %1785 = vmatpush2.bf16.xpose.msra.mxu0 0
  %1786 = vmatprep.subr.bf16.mxu0 0
  %1787 = vmatpush2.bf16.xpose.msra.mxu0 0
  %1788 = vmatprep.subr.bf16.mxu0 0
  %1789 = vmatpush2.bf16.xpose.msra.mxu0 0
  %1790 = vmatprep.subr.bf16.mxu0 0
  %1791 = vmatpush2.bf16.xpose.msra.mxu0 0
  %1792 = vmatprep.subr.bf16.mxu0 0
  %1793 = vmatpush2.bf16.xpose.msra.mxu0 0
  %1794 = vmatprep.mubr.bf16.mxu0 0
  %1795 = vmatmul.mubr.bf16.gmra.mxu0 %v1754
  %v1796 = vpop.f32.mrf.mxu0
  %v1797 = vadd.f32 %v1747, %v1796
  %v1798 = vpop.f32.mrf.mxu0
  %v1799 = vpop.f32.mrf.mxu0
  %v1800 = vadd.f32 %v1747, %v1799
  %v1801 = vpop.f32.mrf.mxu0
  %1802 = vdwg.mxu0
  %v1803 = vadd.f32 %v1672, %v1797
  %v1804 = vadd.f32 %v1673, %v1800
  %v1805 = vld [vmem:[%s4 + $0x4] sm:$0x1]
  %v1806 = vld [vmem:[%s4 + $0x5] sm:$0x1]
  %v1807 = vsel %vm170, %v1803, 0.0
  %1808 = vadd.xlane.f32.xlu0 %v1807
  %v1809 = vpop.xlane.xlu0 %1808
  %v1810 = vsel %vm170, %v1804, 0.0
  %1811 = vadd.xlane.f32.xlu0 %v1810
  %v1812 = vpop.xlane.xlu0 %1811
  %v1813 = vmul.f32 %v1809, %v1641
  %v1814 = vmul.f32 %v1812, %v1641
  %v1815 = vsub.f32 %v1803, %v1813
  %v1816 = vsub.f32 %v1804, %v1814
  %v1817 = vmul.f32 %v1815, %v1815
  %v1818 = vmul.f32 %v1816, %v1816
  %v1819 = vsel %vm170, %v1817, 0.0
  %1820 = vadd.xlane.f32.xlu0 %v1819
  %v1821 = vpop.xlane.xlu0 %1820
  %v1822 = vsel %vm170, %v1818, 0.0
  %1823 = vadd.xlane.f32.xlu0 %v1822
  %v1824 = vpop.xlane.xlu0 %1823
  %v1825 = vmul.f32 %v1821, %v1641
  %v1826 = vmul.f32 %v1824, %v1641
  %v1827 = vadd.f32 %v1825, 1e-06
  %v1828 = vadd.f32 %v1826, 1e-06
  %v1829 = vrsqrt.pop %v1827
  %v1830 = vrsqrt.pop %v1828
  %v1831 = vmul.f32 %v1815, %v1829
  %v1832 = vmul.f32 %v1816, %v1830
  %v1833 = vlaneseq
  %v1834 = vshrl.u32 %v1833, 7
  %v1835 = vsub.s32 0, %v1834
  %v1836 = vrot.slane %v1805, %v1835
  %v1837 = vmul.f32 %v1831, %v1836
  %v1838 = vmul.f32 %v1832, %v1836
  %v1839 = vlaneseq
  %v1840 = vshrl.u32 %v1839, 7
  %v1841 = vsub.s32 0, %v1840
  %v1842 = vrot.slane %v1806, %v1841
  %v1843 = vadd.f32 %v1837, %v1842
  %v1844 = vadd.f32 %v1838, %v1842
  %v1845 = vsel %vm170, %v1843, 0.0
  %v1846 = vrot.slane %v1845, 4
  %v1847 = vadd.f32 %v1845, %v1846
  %v1848 = vrot.slane %v1847, 2
  %v1849 = vadd.f32 %v1847, %v1848
  %v1850 = vrot.slane %v1849, 1
  %v1851 = vadd.f32 %v1849, %v1850
  %v1852 = vsel %vm170, %v1844, 0.0
  %v1853 = vrot.slane %v1852, 4
  %v1854 = vadd.f32 %v1852, %v1853
  %v1855 = vrot.slane %v1854, 2
  %v1856 = vadd.f32 %v1854, %v1855
  %v1857 = vrot.slane %v1856, 1
  %v1858 = vadd.f32 %v1856, %v1857
  %v1859 = vrcp.pop 8.0
  %v1860 = vmul.f32 %v1851, %v1859
  %v1861 = vmul.f32 %v1858, %v1859
  %v1862 = vld [vmem:[%s4 + $0x6] sm:$0x1]
  %v1863 = vld [vmem:[%s4 + $0x7] sm:$0x1]
  %v1864 = vlaneseq
  %v1865 = vshrl.u32 %v1864, 7
  %v1866 = vsub.s32 0, %v1865
  %v1867 = vrot.slane %v1862, %v1866
  %v1868 = vmul.f32 %v1860, %v1867
  %v1869 = vmul.f32 %v1861, %v1867
  %v1872 = vrot.slane %v1869, 7
  %vm1873 = vcmask 1041409
  %v1874 = vsel %vm1873, %v1872, %v1868
  %vm1876 = vcmask 254976
  %v1877 = vsel %vm1876, %v1874, 0.0
  %1878 = vadd.xlane.f32.xlu0 %v1877
  %v1879 = vpop.xlane.xlu0 %1878
  %v1880 = vlaneseq
  %v1881 = vshrl.u32 %v1880, 7
  %v1882 = vsub.s32 0, %v1881
  %v1883 = vrot.slane %v1863, %v1882
  %v1884 = vadd.f32 %v1879, %v1883
  %vm1885 = vcmask 1024
  %1886 = vst.msk [vmem:[%s5] sm:$0x3] %vm1885, %v1884
  // Predicated region
  $region22: #{discriminator_logits.1} parent=0 // pred_check
    _
  $region23: #{discriminator_logits.1} parent=0 // pred_check_branch
    %1888 = sbr.rel (0) target = $region25
  $region24: #{discriminator_logits.1} parent=0 // pred_region
    _
  $region25: #{discriminator_logits.1} parent=0 // pred_fallthru
    _
  // Predicated region
  $region26: #{discriminator_logits.1} parent=0 // pred_check
    _
  $region27: #{discriminator_logits.1} parent=0 // pred_check_branch
    %1890 = sbr.rel (0) target = $region29
  $region28: #{discriminator_logits.1} parent=0 // pred_region
    _
  $region29: #{discriminator_logits.1} parent=0 // pred_fallthru
    _

</llo_original>
